<compile_context>
chip_gen: v7x
topology: tpu7x:2x2x1
jax: 0.10.0
libtpu: 0.0.40
codegen_flags: <defaults>
</compile_context>

<pallas_src>
import functools

import jax
import jax.numpy as jnp
from jax.experimental import pallas as pl
from jax.experimental.pallas import tpu as pltpu


def _round_up(x, m):
    return ((x + m - 1) // m) * m


def _make_kernel(tm, wh, halo):
    """Fused conv(3x3,s2,p1)+BN+LeakyReLU body for static tile sizes.

    Tap (kh, kw) of the conv reads parity phase ((kh%2, kw%2)) at flattened row
    offset (kh//2)*wh + (kw//2) relative to the output row index.
    """
    taps = [((kh % 2) * 2 + (kw % 2), (kh // 2) * wh + (kw // 2))
            for kh in range(3) for kw in range(3)]          # order matches weight layout

    def kernel(cur_ref, nxt_ref, w_ref, b_ref, out_ref, xbuf, acc_ref):
        # cur_ref/nxt_ref: (1, 4, tm, C_in)  current / next M-tile of the 4 phase mats
        # w_ref : (9, C_in, tn)  BN-scale-folded weights, one (C_in, tn) slab per tap
        # b_ref : (1, tn)        fused conv+BN bias (f32)
        # out_ref: (1, tm, tn)   f32
        # xbuf  : (4, tm + halo, C_in) f32 scratch  (tile + halo rows of each phase)
        # acc_ref: (tm, tn) f32 accumulator
        xbuf[:, :tm, :] = cur_ref[0].astype(jnp.float32)
        xbuf[:, tm:, :] = nxt_ref[0, :, :halo, :].astype(jnp.float32)

        for t, (ph, off) in enumerate(taps):
            lhs = xbuf[ph, off:off + tm, :].astype(w_ref.dtype)   # bf16 MXU operand
            part = jnp.dot(lhs, w_ref[t], preferred_element_type=jnp.float32)
            if t == 0:
                acc_ref[...] = part
            else:
                acc_ref[...] += part

        y = acc_ref[...] + b_ref[...]                              # f32 epilogue
        out_ref[0, :, :] = jnp.where(y > 0, y, 0.1 * y).astype(out_ref.dtype)

    return kernel


@functools.partial(jax.jit, static_argnames=("eps", "compute_dtype"))
def downsample_forward(x_nchw, weight, conv_bias, gamma, beta, run_mean, run_var,
                       eps=1e-5, compute_dtype=jnp.bfloat16):
    """Downsample forward: conv(3x3, stride 2, pad 1) + BN(eval) + LeakyReLU(0.1).

    x_nchw : (N, C_in, H, W) f32 ; weight: (C_out, C_in, 3, 3) f32 (PyTorch OIHW)
    returns: (N, C_out, H_out, W_out) f32
    """
    N, C_in, H, W = x_nchw.shape
    C_out = weight.shape[0]
    H_out = (H - 1) // 2 + 1
    W_out = (W - 1) // 2 + 1
    Hh, Wh = H_out + 1, W_out + 1            # spatial extents of each parity phase

    # ---- static tiling ----
    tn = 128
    C_out_p = _round_up(C_out, tn)           # lane-dense output channels
    M_c = H_out * Wh                         # rows computed per image (1 junk col per row)
    halo = _round_up(Wh + 1, 8)              # max tap row offset, sublane aligned
    tm = max(halo, min(_round_up(M_c, 8), 512))
    num_m = pl.cdiv(M_c, tm)
    M_pad = num_m * tm
    M_in = M_pad + tm                        # one extra tile so the "next" block always exists
    num_n = C_out_p // tn

    # ---- layout plumbing (XLA): NCHW -> NHWC, pad, parity-phase split, flatten ----
    x = jnp.transpose(x_nchw, (0, 2, 3, 1))                                   # (N,H,W,C)
    x = jnp.pad(x, ((0, 0), (1, 2 * Hh - H - 1), (1, 2 * Wh - W - 1), (0, 0)))
    x = x.reshape(N, Hh, 2, Wh, 2, C_in).transpose(0, 2, 4, 1, 3, 5)          # (N,2,2,Hh,Wh,C)
    phases = x.reshape(N, 4, Hh * Wh, C_in)
    phases = jnp.pad(phases, ((0, 0), (0, 0), (0, M_in - Hh * Wh), (0, 0)))
    phases = phases.astype(compute_dtype)                                     # bf16 stream

    # ---- fold conv bias + BN(eval) into weight scale / single bias ----
    scale = gamma / jnp.sqrt(run_var + eps)                                   # (C_out,)
    bias = beta + scale * (conv_bias - run_mean)
    w = jnp.transpose(weight, (2, 3, 1, 0)).reshape(9, C_in, C_out)           # tap-major
    w = w * scale[None, None, :]
    w = jnp.pad(w, ((0, 0), (0, 0), (0, C_out_p - C_out))).astype(compute_dtype)
    bias_p = jnp.pad(bias, (0, C_out_p - C_out)).reshape(1, C_out_p).astype(jnp.float32)

    kernel = _make_kernel(tm, Wh, halo)

    flops = 2 * N * M_pad * 9 * C_in * C_out_p
    bytes_accessed = int(2 * phases.size * phases.dtype.itemsize * 1          # cur + nxt
                         + w.size * w.dtype.itemsize * N * num_m
                         + bias_p.size * 4
                         + N * M_pad * C_out_p * 4)

    out_flat = pl.pallas_call(
        kernel,
        out_shape=jax.ShapeDtypeStruct((N, M_pad, C_out_p), jnp.float32),
        grid_spec=pltpu.PrefetchScalarGridSpec(
            num_scalar_prefetch=0,
            grid=(N, num_m, num_n),
            in_specs=[
                pl.BlockSpec((1, 4, tm, C_in), lambda n, i, j: (n, 0, i, 0)),      # cur tile
                pl.BlockSpec((1, 4, tm, C_in), lambda n, i, j: (n, 0, i + 1, 0)),  # next tile (halo)
                pl.BlockSpec((9, C_in, tn), lambda n, i, j: (0, 0, j)),            # folded weights
                pl.BlockSpec((1, tn), lambda n, i, j: (0, j)),                     # fused bias
            ],
            out_specs=pl.BlockSpec((1, tm, tn), lambda n, i, j: (n, i, j)),
            scratch_shapes=[
                pltpu.VMEM((4, tm + halo, C_in), jnp.float32),   # tile + halo assembly
                pltpu.VMEM((tm, tn), jnp.float32),               # f32 accumulator
            ],
        ),
        compiler_params=pltpu.CompilerParams(
            dimension_semantics=("parallel", "parallel", "parallel"),
            vmem_limit_bytes=64 * 1024 * 1024,
        ),
        cost_estimate=pl.CostEstimate(flops=flops, transcendentals=0,
                                      bytes_accessed=bytes_accessed),
    )(phases, phases, w, bias_p)

    # ---- layout plumbing back to the PyTorch NCHW boundary ----
    out = out_flat[:, :M_c, :C_out].reshape(N, H_out, Wh, C_out)[:, :, :W_out, :]
    return jnp.transpose(out, (0, 3, 1, 2))


def _reference(x_nchw, weight, conv_bias, gamma, beta, run_mean, run_var, eps=1e-5):
    conv = jax.lax.conv_general_dilated(
        x_nchw, weight, window_strides=(2, 2), padding=((1, 1), (1, 1)),
        dimension_numbers=("NCHW", "OIHW", "NCHW"))
    conv = conv + conv_bias[None, :, None, None]
    bn = gamma[None, :, None, None] * (conv - run_mean[None, :, None, None]) \
         / jnp.sqrt(run_var[None, :, None, None] + eps) + beta[None, :, None, None]
    return jnp.where(bn > 0, bn, 0.1 * bn)


if __name__ == "__main__":
    key = jax.random.PRNGKey(0)
    k_x, k_w, k_b, k_g, k_be, k_m, k_v = jax.random.split(key, 7)

    N, C_in, H, W = 2, 4, 16, 16
    C_out = 8

    x = jax.random.normal(k_x, (N, C_in, H, W), jnp.float32)
    weight = 0.1 * jax.random.normal(k_w, (C_out, C_in, 3, 3), jnp.float32)
    conv_bias = 0.1 * jax.random.normal(k_b, (C_out,), jnp.float32)
    gamma = 1.0 + 0.1 * jax.random.normal(k_g, (C_out,), jnp.float32)
    beta = 0.1 * jax.random.normal(k_be, (C_out,), jnp.float32)
    run_mean = 0.1 * jax.random.normal(k_m, (C_out,), jnp.float32)
    run_var = jnp.abs(1.0 + 0.1 * jax.random.normal(k_v, (C_out,), jnp.float32))

    ref = _reference(x, weight, conv_bias, gamma, beta, run_mean, run_var)

    # Default perf path: bf16 MXU operands, f32 accumulation (loose tol = operand quantization).
    out_bf16 = jax.block_until_ready(
        downsample_forward(x, weight, conv_bias, gamma, beta, run_mean, run_var))
    assert out_bf16.shape == (N, C_out, H // 2, W // 2)
    assert jnp.allclose(out_bf16, ref, rtol=5e-2, atol=5e-2)

    # f32 operands: tight check of the phase/tap indexing and BN folding math.
    out_f32 = jax.block_until_ready(
        downsample_forward(x, weight, conv_bias, gamma, beta, run_mean, run_var,
                           compute_dtype=jnp.float32))
    assert jnp.allclose(out_f32, ref, rtol=1e-4, atol=1e-4)

    print("KERNEL_OK")
</pallas_src>

<mosaic_0001>
module attributes {stable_mosaic.version = 11 : i64} {
  func.func @kernel(%arg0: i32, %arg1: i32, %arg2: i32, %arg3: memref<1x4x72x4xbf16, #tpu.memory_space<vmem>>, %arg4: memref<1x4x72x4xbf16, #tpu.memory_space<vmem>>, %arg5: memref<9x4x128xbf16, #tpu.memory_space<vmem>>, %arg6: memref<1x128xf32, #tpu.memory_space<vmem>>, %arg7: memref<1x72x128xf32, #tpu.memory_space<vmem>>, %arg8: memref<4x88x4xf32, #tpu.memory_space<vmem>>, %arg9: memref<72x128xf32, #tpu.memory_space<vmem>>) attributes {dimension_semantics = [#tpu.dimension_semantics<parallel>, #tpu.dimension_semantics<parallel>, #tpu.dimension_semantics<parallel>], iteration_bounds = array<i64: 2, 1, 1>, scalar_prefetch = 0 : i64, scratch_operands = 2 : i64, tpu.core_type = #tpu.core_type<tc>, window_params = [{transform_indices = @transform_0, window_bounds = array<i64: 1, 4, 72, 4>}, {transform_indices = @transform_1, window_bounds = array<i64: 1, 4, 72, 4>}, {transform_indices = @transform_2, window_bounds = array<i64: 9, 4, 128>}, {transform_indices = @transform_3, window_bounds = array<i64: 1, 128>}, {transform_indices = @transform_4, window_bounds = array<i64: 1, 72, 128>}]} {
    %c0 = arith.constant 0 : index
    %c0_0 = arith.constant 0 : index
    %c0_1 = arith.constant 0 : index
    %c0_2 = arith.constant 0 : index
    %0 = vector.load %arg3[%c0, %c0_0, %c0_1, %c0_2] : memref<1x4x72x4xbf16, #tpu.memory_space<vmem>>, vector<1x4x72x4xbf16>
    %1 = vector.shape_cast %0 : vector<1x4x72x4xbf16> to vector<4x72x4xbf16>
    %2 = arith.extf %1 : vector<4x72x4xbf16> to vector<4x72x4xf32>
    %c0_3 = arith.constant 0 : index
    %c0_4 = arith.constant 0 : index
    %c0_5 = arith.constant 0 : index
    %3 = vector.load %arg8[%c0_3, %c0_4, %c0_5] : memref<4x88x4xf32, #tpu.memory_space<vmem>>, vector<4x72x4xf32>
    tpu.vector_store %arg8[%c0_3, %c0_4, %c0_5], %2 {strides = array<i32>} : memref<4x88x4xf32, #tpu.memory_space<vmem>>, vector<4x72x4xf32>,
    %c0_6 = arith.constant 0 : index
    %c0_7 = arith.constant 0 : index
    %c0_8 = arith.constant 0 : index
    %c0_9 = arith.constant 0 : index
    %4 = vector.load %arg4[%c0_6, %c0_7, %c0_8, %c0_9] : memref<1x4x72x4xbf16, #tpu.memory_space<vmem>>, vector<1x4x16x4xbf16>
    %5 = vector.shape_cast %4 : vector<1x4x16x4xbf16> to vector<4x16x4xbf16>
    %6 = arith.extf %5 : vector<4x16x4xbf16> to vector<4x16x4xf32>
    %c0_10 = arith.constant 0 : index
    %c72 = arith.constant 72 : index
    %c0_11 = arith.constant 0 : index
    %7 = vector.load %arg8[%c0_10, %c72, %c0_11] : memref<4x88x4xf32, #tpu.memory_space<vmem>>, vector<4x16x4xf32>
    tpu.vector_store %arg8[%c0_10, %c72, %c0_11], %6 {strides = array<i32>} : memref<4x88x4xf32, #tpu.memory_space<vmem>>, vector<4x16x4xf32>,
    %c0_12 = arith.constant 0 : index
    %c0_13 = arith.constant 0 : index
    %c0_14 = arith.constant 0 : index
    %8 = vector.load %arg8[%c0_12, %c0_13, %c0_14] : memref<4x88x4xf32, #tpu.memory_space<vmem>>, vector<1x72x4xf32>
    %9 = vector.shape_cast %8 : vector<1x72x4xf32> to vector<72x4xf32>
    %10 = arith.truncf %9 : vector<72x4xf32> to vector<72x4xbf16>
    %c0_15 = arith.constant 0 : index
    %c0_16 = arith.constant 0 : index
    %c0_17 = arith.constant 0 : index
    %11 = vector.load %arg5[%c0_15, %c0_16, %c0_17] : memref<9x4x128xbf16, #tpu.memory_space<vmem>>, vector<1x4x128xbf16>
    %12 = vector.shape_cast %11 : vector<1x4x128xbf16> to vector<4x128xbf16>
    %cst = arith.constant dense<0.000000e+00> : vector<72x128xf32>
    %13 = tpu.matmul %10, %12, %cst {dimension_numbers = #tpu.dot_dimension_numbers<[1], [0], [0], [1], [0, 0, 1, 1], [], []>} : vector<72x4xbf16>, vector<4x128xbf16>, vector<72x128xf32> -> vector<72x128xf32>
    %c0_18 = arith.constant 0 : index
    %c0_19 = arith.constant 0 : index
    %14 = vector.load %arg9[%c0_18, %c0_19] : memref<72x128xf32, #tpu.memory_space<vmem>>, vector<72x128xf32>
    tpu.vector_store %arg9[%c0_18, %c0_19], %13 {strides = array<i32>} : memref<72x128xf32, #tpu.memory_space<vmem>>, vector<72x128xf32>,
    %c1 = arith.constant 1 : index
    %c0_20 = arith.constant 0 : index
    %c0_21 = arith.constant 0 : index
    %15 = vector.load %arg8[%c1, %c0_20, %c0_21] : memref<4x88x4xf32, #tpu.memory_space<vmem>>, vector<1x72x4xf32>
    %16 = vector.shape_cast %15 : vector<1x72x4xf32> to vector<72x4xf32>
    %17 = arith.truncf %16 : vector<72x4xf32> to vector<72x4xbf16>
    %c1_22 = arith.constant 1 : index
    %c0_23 = arith.constant 0 : index
    %c0_24 = arith.constant 0 : index
    %18 = vector.load %arg5[%c1_22, %c0_23, %c0_24] : memref<9x4x128xbf16, #tpu.memory_space<vmem>>, vector<1x4x128xbf16>
    %19 = vector.shape_cast %18 : vector<1x4x128xbf16> to vector<4x128xbf16>
    %cst_25 = arith.constant dense<0.000000e+00> : vector<72x128xf32>
    %20 = tpu.matmul %17, %19, %cst_25 {dimension_numbers = #tpu.dot_dimension_numbers<[1], [0], [0], [1], [0, 0, 1, 1], [], []>} : vector<72x4xbf16>, vector<4x128xbf16>, vector<72x128xf32> -> vector<72x128xf32>
    %c0_26 = arith.constant 0 : index
    %c0_27 = arith.constant 0 : index
    %21 = vector.load %arg9[%c0_26, %c0_27] : memref<72x128xf32, #tpu.memory_space<vmem>>, vector<72x128xf32>
    %22 = arith.addf %21, %20 : vector<72x128xf32>
    %c0_28 = arith.constant 0 : index
    %c0_29 = arith.constant 0 : index
    %23 = vector.load %arg9[%c0_28, %c0_29] : memref<72x128xf32, #tpu.memory_space<vmem>>, vector<72x128xf32>
    tpu.vector_store %arg9[%c0_28, %c0_29], %22 {strides = array<i32>} : memref<72x128xf32, #tpu.memory_space<vmem>>, vector<72x128xf32>,
    %c0_30 = arith.constant 0 : index
    %c1_31 = arith.constant 1 : index
    %c0_32 = arith.constant 0 : index
    %24 = vector.load %arg8[%c0_30, %c1_31, %c0_32] : memref<4x88x4xf32, #tpu.memory_space<vmem>>, vector<1x72x4xf32>
    %25 = vector.shape_cast %24 : vector<1x72x4xf32> to vector<72x4xf32>
    %26 = arith.truncf %25 : vector<72x4xf32> to vector<72x4xbf16>
    %c2 = arith.constant 2 : index
    %c0_33 = arith.constant 0 : index
    %c0_34 = arith.constant 0 : index
    %27 = vector.load %arg5[%c2, %c0_33, %c0_34] : memref<9x4x128xbf16, #tpu.memory_space<vmem>>, vector<1x4x128xbf16>
    %28 = vector.shape_cast %27 : vector<1x4x128xbf16> to vector<4x128xbf16>
    %cst_35 = arith.constant dense<0.000000e+00> : vector<72x128xf32>
    %29 = tpu.matmul %26, %28, %cst_35 {dimension_numbers = #tpu.dot_dimension_numbers<[1], [0], [0], [1], [0, 0, 1, 1], [], []>} : vector<72x4xbf16>, vector<4x128xbf16>, vector<72x128xf32> -> vector<72x128xf32>
    %c0_36 = arith.constant 0 : index
    %c0_37 = arith.constant 0 : index
    %30 = vector.load %arg9[%c0_36, %c0_37] : memref<72x128xf32, #tpu.memory_space<vmem>>, vector<72x128xf32>
    %31 = arith.addf %30, %29 : vector<72x128xf32>
    %c0_38 = arith.constant 0 : index
    %c0_39 = arith.constant 0 : index
    %32 = vector.load %arg9[%c0_38, %c0_39] : memref<72x128xf32, #tpu.memory_space<vmem>>, vector<72x128xf32>
    tpu.vector_store %arg9[%c0_38, %c0_39], %31 {strides = array<i32>} : memref<72x128xf32, #tpu.memory_space<vmem>>, vector<72x128xf32>,
    %c2_40 = arith.constant 2 : index
    %c0_41 = arith.constant 0 : index
    %c0_42 = arith.constant 0 : index
    %33 = vector.load %arg8[%c2_40, %c0_41, %c0_42] : memref<4x88x4xf32, #tpu.memory_space<vmem>>, vector<1x72x4xf32>
    %34 = vector.shape_cast %33 : vector<1x72x4xf32> to vector<72x4xf32>
    %35 = arith.truncf %34 : vector<72x4xf32> to vector<72x4xbf16>
    %c3 = arith.constant 3 : index
    %c0_43 = arith.constant 0 : index
    %c0_44 = arith.constant 0 : index
    %36 = vector.load %arg5[%c3, %c0_43, %c0_44] : memref<9x4x128xbf16, #tpu.memory_space<vmem>>, vector<1x4x128xbf16>
    %37 = vector.shape_cast %36 : vector<1x4x128xbf16> to vector<4x128xbf16>
    %cst_45 = arith.constant dense<0.000000e+00> : vector<72x128xf32>
    %38 = tpu.matmul %35, %37, %cst_45 {dimension_numbers = #tpu.dot_dimension_numbers<[1], [0], [0], [1], [0, 0, 1, 1], [], []>} : vector<72x4xbf16>, vector<4x128xbf16>, vector<72x128xf32> -> vector<72x128xf32>
    %c0_46 = arith.constant 0 : index
    %c0_47 = arith.constant 0 : index
    %39 = vector.load %arg9[%c0_46, %c0_47] : memref<72x128xf32, #tpu.memory_space<vmem>>, vector<72x128xf32>
    %40 = arith.addf %39, %38 : vector<72x128xf32>
    %c0_48 = arith.constant 0 : index
    %c0_49 = arith.constant 0 : index
    %41 = vector.load %arg9[%c0_48, %c0_49] : memref<72x128xf32, #tpu.memory_space<vmem>>, vector<72x128xf32>
    tpu.vector_store %arg9[%c0_48, %c0_49], %40 {strides = array<i32>} : memref<72x128xf32, #tpu.memory_space<vmem>>, vector<72x128xf32>,
    %c3_50 = arith.constant 3 : index
    %c0_51 = arith.constant 0 : index
    %c0_52 = arith.constant 0 : index
    %42 = vector.load %arg8[%c3_50, %c0_51, %c0_52] : memref<4x88x4xf32, #tpu.memory_space<vmem>>, vector<1x72x4xf32>
    %43 = vector.shape_cast %42 : vector<1x72x4xf32> to vector<72x4xf32>
    %44 = arith.truncf %43 : vector<72x4xf32> to vector<72x4xbf16>
    %c4 = arith.constant 4 : index
    %c0_53 = arith.constant 0 : index
    %c0_54 = arith.constant 0 : index
    %45 = vector.load %arg5[%c4, %c0_53, %c0_54] : memref<9x4x128xbf16, #tpu.memory_space<vmem>>, vector<1x4x128xbf16>
    %46 = vector.shape_cast %45 : vector<1x4x128xbf16> to vector<4x128xbf16>
    %cst_55 = arith.constant dense<0.000000e+00> : vector<72x128xf32>
    %47 = tpu.matmul %44, %46, %cst_55 {dimension_numbers = #tpu.dot_dimension_numbers<[1], [0], [0], [1], [0, 0, 1, 1], [], []>} : vector<72x4xbf16>, vector<4x128xbf16>, vector<72x128xf32> -> vector<72x128xf32>
    %c0_56 = arith.constant 0 : index
    %c0_57 = arith.constant 0 : index
    %48 = vector.load %arg9[%c0_56, %c0_57] : memref<72x128xf32, #tpu.memory_space<vmem>>, vector<72x128xf32>
    %49 = arith.addf %48, %47 : vector<72x128xf32>
    %c0_58 = arith.constant 0 : index
    %c0_59 = arith.constant 0 : index
    %50 = vector.load %arg9[%c0_58, %c0_59] : memref<72x128xf32, #tpu.memory_space<vmem>>, vector<72x128xf32>
    tpu.vector_store %arg9[%c0_58, %c0_59], %49 {strides = array<i32>} : memref<72x128xf32, #tpu.memory_space<vmem>>, vector<72x128xf32>,
    %c2_60 = arith.constant 2 : index
    %c1_61 = arith.constant 1 : index
    %c0_62 = arith.constant 0 : index
    %51 = vector.load %arg8[%c2_60, %c1_61, %c0_62] : memref<4x88x4xf32, #tpu.memory_space<vmem>>, vector<1x72x4xf32>
    %52 = vector.shape_cast %51 : vector<1x72x4xf32> to vector<72x4xf32>
    %53 = arith.truncf %52 : vector<72x4xf32> to vector<72x4xbf16>
    %c5 = arith.constant 5 : index
    %c0_63 = arith.constant 0 : index
    %c0_64 = arith.constant 0 : index
    %54 = vector.load %arg5[%c5, %c0_63, %c0_64] : memref<9x4x128xbf16, #tpu.memory_space<vmem>>, vector<1x4x128xbf16>
    %55 = vector.shape_cast %54 : vector<1x4x128xbf16> to vector<4x128xbf16>
    %cst_65 = arith.constant dense<0.000000e+00> : vector<72x128xf32>
    %56 = tpu.matmul %53, %55, %cst_65 {dimension_numbers = #tpu.dot_dimension_numbers<[1], [0], [0], [1], [0, 0, 1, 1], [], []>} : vector<72x4xbf16>, vector<4x128xbf16>, vector<72x128xf32> -> vector<72x128xf32>
    %c0_66 = arith.constant 0 : index
    %c0_67 = arith.constant 0 : index
    %57 = vector.load %arg9[%c0_66, %c0_67] : memref<72x128xf32, #tpu.memory_space<vmem>>, vector<72x128xf32>
    %58 = arith.addf %57, %56 : vector<72x128xf32>
    %c0_68 = arith.constant 0 : index
    %c0_69 = arith.constant 0 : index
    %59 = vector.load %arg9[%c0_68, %c0_69] : memref<72x128xf32, #tpu.memory_space<vmem>>, vector<72x128xf32>
    tpu.vector_store %arg9[%c0_68, %c0_69], %58 {strides = array<i32>} : memref<72x128xf32, #tpu.memory_space<vmem>>, vector<72x128xf32>,
    %c0_70 = arith.constant 0 : index
    %c9 = arith.constant 9 : index
    %c0_71 = arith.constant 0 : index
    %60 = vector.load %arg8[%c0_70, %c9, %c0_71] : memref<4x88x4xf32, #tpu.memory_space<vmem>>, vector<1x72x4xf32>
    %61 = vector.shape_cast %60 : vector<1x72x4xf32> to vector<72x4xf32>
    %62 = arith.truncf %61 : vector<72x4xf32> to vector<72x4xbf16>
    %c6 = arith.constant 6 : index
    %c0_72 = arith.constant 0 : index
    %c0_73 = arith.constant 0 : index
    %63 = vector.load %arg5[%c6, %c0_72, %c0_73] : memref<9x4x128xbf16, #tpu.memory_space<vmem>>, vector<1x4x128xbf16>
    %64 = vector.shape_cast %63 : vector<1x4x128xbf16> to vector<4x128xbf16>
    %cst_74 = arith.constant dense<0.000000e+00> : vector<72x128xf32>
    %65 = tpu.matmul %62, %64, %cst_74 {dimension_numbers = #tpu.dot_dimension_numbers<[1], [0], [0], [1], [0, 0, 1, 1], [], []>} : vector<72x4xbf16>, vector<4x128xbf16>, vector<72x128xf32> -> vector<72x128xf32>
    %c0_75 = arith.constant 0 : index
    %c0_76 = arith.constant 0 : index
    %66 = vector.load %arg9[%c0_75, %c0_76] : memref<72x128xf32, #tpu.memory_space<vmem>>, vector<72x128xf32>
    %67 = arith.addf %66, %65 : vector<72x128xf32>
    %c0_77 = arith.constant 0 : index
    %c0_78 = arith.constant 0 : index
    %68 = vector.load %arg9[%c0_77, %c0_78] : memref<72x128xf32, #tpu.memory_space<vmem>>, vector<72x128xf32>
    tpu.vector_store %arg9[%c0_77, %c0_78], %67 {strides = array<i32>} : memref<72x128xf32, #tpu.memory_space<vmem>>, vector<72x128xf32>,
    %c1_79 = arith.constant 1 : index
    %c9_80 = arith.constant 9 : index
    %c0_81 = arith.constant 0 : index
    %69 = vector.load %arg8[%c1_79, %c9_80, %c0_81] : memref<4x88x4xf32, #tpu.memory_space<vmem>>, vector<1x72x4xf32>
    %70 = vector.shape_cast %69 : vector<1x72x4xf32> to vector<72x4xf32>
    %71 = arith.truncf %70 : vector<72x4xf32> to vector<72x4xbf16>
    %c7 = arith.constant 7 : index
    %c0_82 = arith.constant 0 : index
    %c0_83 = arith.constant 0 : index
    %72 = vector.load %arg5[%c7, %c0_82, %c0_83] : memref<9x4x128xbf16, #tpu.memory_space<vmem>>, vector<1x4x128xbf16>
    %73 = vector.shape_cast %72 : vector<1x4x128xbf16> to vector<4x128xbf16>
    %cst_84 = arith.constant dense<0.000000e+00> : vector<72x128xf32>
    %74 = tpu.matmul %71, %73, %cst_84 {dimension_numbers = #tpu.dot_dimension_numbers<[1], [0], [0], [1], [0, 0, 1, 1], [], []>} : vector<72x4xbf16>, vector<4x128xbf16>, vector<72x128xf32> -> vector<72x128xf32>
    %c0_85 = arith.constant 0 : index
    %c0_86 = arith.constant 0 : index
    %75 = vector.load %arg9[%c0_85, %c0_86] : memref<72x128xf32, #tpu.memory_space<vmem>>, vector<72x128xf32>
    %76 = arith.addf %75, %74 : vector<72x128xf32>
    %c0_87 = arith.constant 0 : index
    %c0_88 = arith.constant 0 : index
    %77 = vector.load %arg9[%c0_87, %c0_88] : memref<72x128xf32, #tpu.memory_space<vmem>>, vector<72x128xf32>
    tpu.vector_store %arg9[%c0_87, %c0_88], %76 {strides = array<i32>} : memref<72x128xf32, #tpu.memory_space<vmem>>, vector<72x128xf32>,
    %c0_89 = arith.constant 0 : index
    %c10 = arith.constant 10 : index
    %c0_90 = arith.constant 0 : index
    %78 = vector.load %arg8[%c0_89, %c10, %c0_90] : memref<4x88x4xf32, #tpu.memory_space<vmem>>, vector<1x72x4xf32>
    %79 = vector.shape_cast %78 : vector<1x72x4xf32> to vector<72x4xf32>
    %80 = arith.truncf %79 : vector<72x4xf32> to vector<72x4xbf16>
    %c8 = arith.constant 8 : index
    %c0_91 = arith.constant 0 : index
    %c0_92 = arith.constant 0 : index
    %81 = vector.load %arg5[%c8, %c0_91, %c0_92] : memref<9x4x128xbf16, #tpu.memory_space<vmem>>, vector<1x4x128xbf16>
    %82 = vector.shape_cast %81 : vector<1x4x128xbf16> to vector<4x128xbf16>
    %cst_93 = arith.constant dense<0.000000e+00> : vector<72x128xf32>
    %83 = tpu.matmul %80, %82, %cst_93 {dimension_numbers = #tpu.dot_dimension_numbers<[1], [0], [0], [1], [0, 0, 1, 1], [], []>} : vector<72x4xbf16>, vector<4x128xbf16>, vector<72x128xf32> -> vector<72x128xf32>
    %c0_94 = arith.constant 0 : index
    %c0_95 = arith.constant 0 : index
    %84 = vector.load %arg9[%c0_94, %c0_95] : memref<72x128xf32, #tpu.memory_space<vmem>>, vector<72x128xf32>
    %85 = arith.addf %84, %83 : vector<72x128xf32>
    %c0_96 = arith.constant 0 : index
    %c0_97 = arith.constant 0 : index
    %86 = vector.load %arg9[%c0_96, %c0_97] : memref<72x128xf32, #tpu.memory_space<vmem>>, vector<72x128xf32>
    tpu.vector_store %arg9[%c0_96, %c0_97], %85 {strides = array<i32>} : memref<72x128xf32, #tpu.memory_space<vmem>>, vector<72x128xf32>,
    %c0_98 = arith.constant 0 : index
    %c0_99 = arith.constant 0 : index
    %87 = vector.load %arg9[%c0_98, %c0_99] : memref<72x128xf32, #tpu.memory_space<vmem>>, vector<72x128xf32>
    %c0_100 = arith.constant 0 : index
    %c0_101 = arith.constant 0 : index
    %88 = vector.load %arg6[%c0_100, %c0_101] : memref<1x128xf32, #tpu.memory_space<vmem>>, vector<1x128xf32>
    %89 = vector.broadcast %88 : vector<1x128xf32> to vector<72x128xf32>
    %90 = arith.addf %87, %89 : vector<72x128xf32>
    %cst_102 = arith.constant 0.000000e+00 : f32
    %91 = vector.broadcast %cst_102 : f32 to vector<72x128xf32>
    %92 = arith.cmpf ogt, %90, %91 : vector<72x128xf32>
    %cst_103 = arith.constant 1.000000e-01 : f32
    %93 = vector.broadcast %cst_103 : f32 to vector<72x128xf32>
    %94 = arith.mulf %93, %90 : vector<72x128xf32>
    %95 = arith.select %92, %90, %94 : vector<72x128xi1>, vector<72x128xf32>
    %c0_104 = arith.constant 0 : index
    %c0_105 = arith.constant 0 : index
    %c0_106 = arith.constant 0 : index
    %96 = vector.load %arg7[%c0_104, %c0_105, %c0_106] : memref<1x72x128xf32, #tpu.memory_space<vmem>>, vector<1x72x128xf32>
    %97 = vector.shape_cast %96 : vector<1x72x128xf32> to vector<72x128xf32>
    %98 = vector.shape_cast %95 : vector<72x128xf32> to vector<1x72x128xf32>
    tpu.vector_store %arg7[%c0_104, %c0_105, %c0_106], %98 {strides = array<i32>} : memref<1x72x128xf32, #tpu.memory_space<vmem>>, vector<1x72x128xf32>,
    return
  }
  func.func @transform_0(%arg0: i32, %arg1: i32, %arg2: i32) -> (i32, i32, i32, i32) {
    %c0_i32 = arith.constant 0 : i32
    %c0_i32_0 = arith.constant 0 : i32
    %c0_i32_1 = arith.constant 0 : i32
    return %arg0, %c0_i32, %arg1, %c0_i32_0 : i32, i32, i32, i32
  }
  func.func @transform_1(%arg0: i32, %arg1: i32, %arg2: i32) -> (i32, i32, i32, i32) {
    %c1_i32 = arith.constant 1 : i32
    %0 = arith.addi %arg1, %c1_i32 : i32
    %c0_i32 = arith.constant 0 : i32
    %c0_i32_0 = arith.constant 0 : i32
    %c0_i32_1 = arith.constant 0 : i32
    return %arg0, %c0_i32, %0, %c0_i32_0 : i32, i32, i32, i32
  }
  func.func @transform_2(%arg0: i32, %arg1: i32, %arg2: i32) -> (i32, i32, i32) {
    %c0_i32 = arith.constant 0 : i32
    %c0_i32_0 = arith.constant 0 : i32
    %c0_i32_1 = arith.constant 0 : i32
    return %c0_i32, %c0_i32_0, %arg2 : i32, i32, i32
  }
  func.func @transform_3(%arg0: i32, %arg1: i32, %arg2: i32) -> (i32, i32) {
    %c0_i32 = arith.constant 0 : i32
    %c0_i32_0 = arith.constant 0 : i32
    return %c0_i32, %arg2 : i32, i32
  }
  func.func @transform_4(%arg0: i32, %arg1: i32, %arg2: i32) -> (i32, i32, i32) {
    %c0_i32 = arith.constant 0 : i32
    return %arg0, %arg1, %arg2 : i32, i32, i32
  }
}

</mosaic_0001>

<llo_original>
// kernel: downsample_forward.1
$region0: #{downsample_forward.1}
  #allocation0 [shape = 'u32[]', space=smem, size = 0x4, offset = 0x4, fixed_abs, tag = 'smem constant byte address 0x4 - core index']
  #allocation1 [shape = 'u32[144,128]{1,0:T(1,128)}', space=vmem, size = 0x12000, scoped, tag = 'internal scratch']
  #allocation2 [shape = 'f32[4,88,4]{2,1,0:T(8,128)}', space=vmem, size = 0x2c000, scoped, tag = 'scratch operand']
  #allocation3 [shape = 'f32[72,128]{1,0:T(8,128)}', space=vmem, size = 0x9000, scoped, tag = 'scratch operand']
  #allocation13 [shape = 's32[]', space=sflag, size = 0x4, offset = 0, fixed_abs, tag = 'sflag constant byte address 0x0 - dummy sync flag']
  #allocation15 [shape = 's32[]', space=sflag, size = 0x4, offset = 0, fixed_abs, tag = 'sflag constant byte address 0x0 - dummy sync flag']
  %s0 = inlined_call_operand.hbm [shape: bf16[2,4,144,4], index: 0, kind: input, shape index: {}, may-alias: {0,1}]
  %s1 = inlined_call_operand.hbm [shape: bf16[2,4,144,4], index: 1, kind: input, shape index: {}, may-alias: {0,1}]
  %s2 = inlined_call_operand.hbm [shape: bf16[9,4,128], index: 2, kind: input, shape index: {}]
  %s3 = inlined_call_operand.hbm [shape: f32[1,128], index: 3, kind: input, shape index: {}]
  %s4 = inlined_call_operand.hbm [shape: f32[2,72,128], index: 4, kind: output, shape index: {}]
  %s5 = sld [smem:[#allocation0]]
  $region65: #{downsample_forward.1} parent=0
    _
  %s7 = ssub.s32 1, %s5
  %s8 = scalar_select 0, %s7, %s5
  $region1: #{downsample_forward.1} parent=0
    #allocation4 [shape = 'u8[147456]{0}', space=vmem, size = 0x24000, scoped, tag = 'input window, operand 0']
    #allocation5 [shape = 's32[2]{0}', space=sflag, size = 0x8, scoped, tag = 'scoped memory for downsample_forward.1']
    #allocation6 [shape = 's32[2]{0}', space=sflag, size = 0x8, scoped, tag = 'scoped memory for downsample_forward.1']
    #allocation7 [shape = 'u8[147456]{0}', space=vmem, size = 0x24000, scoped, tag = 'input window, operand 1']
    #allocation8 [shape = 's32[2]{0}', space=sflag, size = 0x8, scoped, tag = 'scoped memory for downsample_forward.1']
    #allocation9 [shape = 'u8[9216]{0}', space=vmem, size = 0x2400, scoped, tag = 'input window, operand 2, single buffered']
    #allocation10 [shape = 'u8[512]{0}', space=vmem, size = 0x400, scoped, tag = 'input window, operand 3, single buffered']
    #allocation11 [shape = 's32[1]{0}', space=sflag, size = 0x4, scoped, tag = 'scoped memory for downsample_forward.1']
    #allocation12 [shape = 'u8[73728]{0}', space=vmem, size = 0x12000, scoped, tag = 'output window, operand 0']
    %9 = vsyncpa [#allocation5], 0
    %s10 = scalar_lea.sflag [#allocation5], 1
    %11 = vsyncpa %s10, 0
    %12 = vsyncpa [#allocation8], 0
    %s13 = scalar_lea.sflag [#allocation8], 1
    %14 = vsyncpa %s13, 0
    %15 = vsyncpa [#allocation11], 0
    %16 = vsyncpa [#allocation6], 0
    %s17 = scalar_lea.sflag [#allocation6], 1
    %18 = vsyncpa %s17, 0
    loop: start=0, step=1, limit=4
    $region2: #{downsample_forward.1} parent=1 // loop_pre_header
      _
    $region3: #{downsample_forward.1} parent=1 // loop_header
      %s20 = sphi 0, %s24
      %p21 = scmp.ge.s32.totalorder %s20, 4
      %s27 = sphi 0, %s46
      %s28 = sphi 0, %s42
      %s29 = sphi 0, %s38
      %s30 = sphi 0, %s27
      %s31 = sphi 0, %s28
      %s32 = sphi 0, %s29
      %s33 = sphi 0, %s30
      %s34 = sphi 0, %s31
      %s35 = sphi 0, %s32
      %s51 = sphi 0, %s53
      %s54 = sphi 0, %s51
      %s55 = sphi 0, %s54
      %s71 = sphi 0, %s55
      %s81 = sphi 0, %s83
      %s84 = sphi 0, %s81
      %s85 = sphi 0, %s84
      %s101 = sphi 0, %s85
      %s107 = sphi 0, %s109
      %s110 = sphi 0, %s107
      %s111 = sphi 0, %s110
      %s127 = sphi 0, %s111
      %s133 = sphi 0, %s135
      %s136 = sphi 0, %s133
      %s137 = sphi 0, %s136
      %s153 = sphi 0, %s137
      %s163 = sphi 0, %s165
      %s166 = sphi 0, %s163
      %s167 = sphi 0, %s166
      %s183 = sphi 0, %s167
    $region4: #{downsample_forward.1} parent=1 // loop_header_branch
      %23 = sbr.rel (%p21) target = $region8
    $region5: #{downsample_forward.1} parent=1 // loop_body
      %s25 = ssub.s32 %s20, 1
      %s26 = ssub.s32 %s20, 2
      %s36 = sadd.s32 1, %s29
      %p37 = scmp.ge.s32.totalorder %s36, 1
      %s38 = scalar_select %p37, 0, %s36
      %s39 = sadd.s32 1, %s28
      %s40 = scalar_select %p37, %s39, %s28
      %p41 = scmp.ge.s32.totalorder %s40, 1
      %s42 = scalar_select %p41, 0, %s40
      %s43 = sadd.s32 1, %s27
      %s44 = scalar_select %p41, %s43, %s27
      %p45 = scmp.ge.s32.totalorder %s44, 2
      %s46 = scalar_select %p45, 0, %s44
      %s47 = ssub.s32 %s27, %s46
      %s48 = ssub.s32 %s28, %s42
      %s49 = sor.u32 %s47, %s48
      %p50 = scmp.eq.s32.totalorder %s49, 0
      %s52 = sadd.s32 %s51, 1
      %s53 = scalar_select %p50, %s51, %s52
      %p56 = pneg %p50
      %p57 = scmp.eq.s32.totalorder %s20, 1
      %p58 = por %p56, %p57
      %p59 = scmp.ne.s32.totalorder %s51, %s54
      %p60 = scmp.eq.s32.totalorder %s20, 0
      %p61 = por %p59, %p60
      %p62 = scmp.ne.s32.totalorder %s51, %s54
      %p63 = scmp.eq.s32.totalorder %s25, 1
      %p64 = por %p62, %p63
      %p65 = scmp.ne.s32.totalorder %s54, %s55
      %p66 = scmp.eq.s32.totalorder %s25, 0
      %p67 = por %p65, %p66
      %p68 = scmp.ne.s32.totalorder %s54, %s55
      %p69 = scmp.eq.s32.totalorder %s26, 1
      %p70 = por %p68, %p69
      %p72 = scmp.ne.s32.totalorder %s55, %s71
      %p73 = scmp.eq.s32.totalorder %s26, 0
      %p74 = por %p72, %p73
      %s75 = sadd.s32 %s28, 1
      %s76 = sadd.s32 %s42, 1
      %s77 = ssub.s32 %s27, %s46
      %s78 = ssub.s32 %s75, %s76
      %s79 = sor.u32 %s77, %s78
      %p80 = scmp.eq.s32.totalorder %s79, 0
      %s82 = sadd.s32 %s81, 1
      %s83 = scalar_select %p80, %s81, %s82
      %p86 = pneg %p80
      %p87 = scmp.eq.s32.totalorder %s20, 1
      %p88 = por %p86, %p87
      %p89 = scmp.ne.s32.totalorder %s81, %s84
      %p90 = scmp.eq.s32.totalorder %s20, 0
      %p91 = por %p89, %p90
      %p92 = scmp.ne.s32.totalorder %s81, %s84
      %p93 = scmp.eq.s32.totalorder %s25, 1
      %p94 = por %p92, %p93
      %p95 = scmp.ne.s32.totalorder %s84, %s85
      %p96 = scmp.eq.s32.totalorder %s25, 0
      %p97 = por %p95, %p96
      %p98 = scmp.ne.s32.totalorder %s84, %s85
      %p99 = scmp.eq.s32.totalorder %s26, 1
      %p100 = por %p98, %p99
      %p102 = scmp.ne.s32.totalorder %s85, %s101
      %p103 = scmp.eq.s32.totalorder %s26, 0
      %p104 = por %p102, %p103
      %s105 = ssub.s32 %s29, %s38
      %p106 = scmp.eq.s32.totalorder %s105, 0
      %s108 = sadd.s32 %s107, 1
      %s109 = scalar_select %p106, %s107, %s108
      %p112 = pneg %p106
      %p113 = scmp.eq.s32.totalorder %s20, 1
      %p114 = por %p112, %p113
      %p115 = scmp.ne.s32.totalorder %s107, %s110
      %p116 = scmp.eq.s32.totalorder %s20, 0
      %p117 = por %p115, %p116
      %p118 = scmp.ne.s32.totalorder %s107, %s110
      %p119 = scmp.eq.s32.totalorder %s25, 1
      %p120 = por %p118, %p119
      %p121 = scmp.ne.s32.totalorder %s110, %s111
      %p122 = scmp.eq.s32.totalorder %s25, 0
      %p123 = por %p121, %p122
      %p124 = scmp.ne.s32.totalorder %s110, %s111
      %p125 = scmp.eq.s32.totalorder %s26, 1
      %p126 = por %p124, %p125
      %p128 = scmp.ne.s32.totalorder %s111, %s127
      %p129 = scmp.eq.s32.totalorder %s26, 0
      %p130 = por %p128, %p129
      %s131 = ssub.s32 %s29, %s38
      %p132 = scmp.eq.s32.totalorder %s131, 0
      %s134 = sadd.s32 %s133, 1
      %s135 = scalar_select %p132, %s133, %s134
      %p138 = pneg %p132
      %p139 = scmp.eq.s32.totalorder %s20, 1
      %p140 = por %p138, %p139
      %p141 = scmp.ne.s32.totalorder %s133, %s136
      %p142 = scmp.eq.s32.totalorder %s20, 0
      %p143 = por %p141, %p142
      %p144 = scmp.ne.s32.totalorder %s133, %s136
      %p145 = scmp.eq.s32.totalorder %s25, 1
      %p146 = por %p144, %p145
      %p147 = scmp.ne.s32.totalorder %s136, %s137
      %p148 = scmp.eq.s32.totalorder %s25, 0
      %p149 = por %p147, %p148
      %p150 = scmp.ne.s32.totalorder %s136, %s137
      %p151 = scmp.eq.s32.totalorder %s26, 1
      %p152 = por %p150, %p151
      %p154 = scmp.ne.s32.totalorder %s137, %s153
      %p155 = scmp.eq.s32.totalorder %s26, 0
      %p156 = por %p154, %p155
      %s157 = ssub.s32 %s27, %s46
      %s158 = ssub.s32 %s28, %s42
      %s159 = sor.u32 %s157, %s158
      %s160 = ssub.s32 %s29, %s38
      %s161 = sor.u32 %s159, %s160
      %p162 = scmp.eq.s32.totalorder %s161, 0
      %s164 = sadd.s32 %s163, 1
      %s165 = scalar_select %p162, %s163, %s164
      %p168 = pneg %p162
      %p169 = scmp.eq.s32.totalorder %s20, 1
      %p170 = por %p168, %p169
      %p171 = scmp.ne.s32.totalorder %s163, %s166
      %p172 = scmp.eq.s32.totalorder %s20, 0
      %p173 = por %p171, %p172
      %p174 = scmp.ne.s32.totalorder %s163, %s166
      %p175 = scmp.eq.s32.totalorder %s25, 1
      %p176 = por %p174, %p175
      %p177 = scmp.ne.s32.totalorder %s166, %s167
      %p178 = scmp.eq.s32.totalorder %s25, 0
      %p179 = por %p177, %p178
      %p180 = scmp.ne.s32.totalorder %s166, %s167
      %p181 = scmp.eq.s32.totalorder %s26, 1
      %p182 = por %p180, %p181
      %p184 = scmp.ne.s32.totalorder %s167, %s183
      %p185 = scmp.eq.s32.totalorder %s26, 0
      %p186 = por %p184, %p185
      %p187 = scmp.le.s32.totalorder 1, %s20
      %p188 = scmp.lt.s32.totalorder %s20, 3
      %p189 = pnand %p187, %p188
      %p190 = pneg %p189
      // Predicated region
      $region9: #{downsample_forward.1} parent=5 // pred_check
        _
      $region10: #{downsample_forward.1} parent=5 // pred_check_branch
        %192 = sbr.rel (%p189) target = $region12
      $region11: #{downsample_forward.1} parent=5 // pred_region
        %s193 = ssub.s32 %s20, 1
        // Predicated region
        $region13: #{downsample_forward.1} parent=11 // pred_check
          %p194 = pneg %p123
        $region14: #{downsample_forward.1} parent=11 // pred_check_branch
          %196 = sbr.rel (%p194) target = $region16
        $region15: #{downsample_forward.1} parent=11 // pred_region
          %s198 = ssub.s32 288, 288
          %199 = vsyncadd [#allocation8], %s198
          %s200 = smul.addr %s32, 32
          %s201 = scalar_lea.hbm %s2, %s200
          %s202 = sshll.u32 [#allocation9], 4
          %s203 = int_to_ptr.vmem [resolvable:$true] %s202
          %208 = dma.hbm_to_vmem [thread:$0]  %s201, 288, %s203, [#allocation8], 32, 32, 2
        $region16: #{downsample_forward.1} parent=11 // pred_fallthru
          _
        // Predicated region
        $region17: #{downsample_forward.1} parent=11 // pred_check
          %p209 = pneg %p149
        $region18: #{downsample_forward.1} parent=11 // pred_check_branch
          %211 = sbr.rel (%p209) target = $region20
        $region19: #{downsample_forward.1} parent=11 // pred_region
          %s213 = ssub.s32 16, 16
          %214 = vsyncadd [#allocation11], %s213
          %s215 = smul.addr %s32, 16
          %s216 = scalar_lea.hbm %s3, %s215
          %s218 = sshll.u32 [#allocation10], 4
          %s219 = int_to_ptr.vmem [resolvable:$true] %s218
          %221 = dma.hbm_to_vmem [thread:$0]  %s216, 16, %s219, [#allocation11]
        $region20: #{downsample_forward.1} parent=11 // pred_fallthru
          _
      $region12: #{downsample_forward.1} parent=5 // pred_fallthru
        _
      %p222 = scmp.lt.s32.totalorder %s20, 2
      // Predicated region
      $region21: #{downsample_forward.1} parent=5 // pred_check
        %p223 = pneg %p222
      $region22: #{downsample_forward.1} parent=5 // pred_check_branch
        %225 = sbr.rel (%p223) target = $region24
      $region23: #{downsample_forward.1} parent=5 // pred_region
        // Predicated region
        $region25: #{downsample_forward.1} parent=23 // pred_check
          %p226 = pneg %p61
        $region26: #{downsample_forward.1} parent=23 // pred_check_branch
          %228 = sbr.rel (%p226) target = $region28
        $region27: #{downsample_forward.1} parent=23 // pred_region
          #allocation14 [shape = 'u32[6]{0}', space=smem, size = 0x18, scoped, tag = 'DMA stride descriptor']
          %s229 = sand.u32 %s51, 1
          %s230 = scalar_lea.sflag [#allocation5], %s229
          %s231 = sand.u32 %s51, 1
          %s232 = smul.addr %s231, 144
          %s233 = scalar_lea.vmem [#allocation4], %s232
          %s234 = smul.u32 9, %s28
          %s236 = ssub.s32 2304, 2304
          %237 = vsyncadd %s230, %s236
          %s238 = smul.addr %s27, 72
          %s239 = sadd.s32 %s234, %s238
          %s240 = smul.addr %s239, 64
          %s241 = scalar_lea.hbm %s0, %s240
          %s243 = sshll.u32 1, 14
          %s244 = sxor.u32 4294967295, %s243
          %s246 = sld [smem:[#allocation0]]
          %s247 = sadd.s32 2, %s246
          %s249 = sshll.u32 7, 26
          %s250 = sxor.u32 4294967295, %s249
          %s251 = sand.u32 0, %s250
          %s252 = sshll.u32 %s247, 26
          %s253 = sor.u32 %s251, %s252
          %s254 = sshll.u32 %s233, 4
          %s255 = int_to_ptr.vmem [resolvable:$true] %s254
          %261 = sst [smem:[#allocation14]] 1152
          %s262 = scalar_lea.smem [#allocation14], 1
          %263 = sst [smem:[%s262]] 576
          %s264 = scalar_lea.smem [#allocation14], 2
          %265 = sst [smem:[%s264]] 9
          %s266 = scalar_lea.smem [#allocation14], 3
          %267 = sst [smem:[%s266]] 64
          %s268 = scalar_lea.smem [#allocation14], 4
          %269 = sst [smem:[%s268]] 64
          %s270 = scalar_lea.smem [#allocation14], 5
          %271 = sst [smem:[%s270]] 4
          %273 = dma.general %s241, 2304, %s255, %s230, [#allocation13], [#allocation14], %s253, 0
        $region28: #{downsample_forward.1} parent=23 // pred_fallthru
          _
        // Predicated region
        $region29: #{downsample_forward.1} parent=23 // pred_check
          %p274 = pneg %p91
        $region30: #{downsample_forward.1} parent=23 // pred_check_branch
          %276 = sbr.rel (%p274) target = $region32
        $region31: #{downsample_forward.1} parent=23 // pred_region
          #allocation16 [shape = 'u32[6]{0}', space=smem, size = 0x18, scoped, tag = 'DMA stride descriptor']
          %s277 = sand.u32 %s20, 1
          %s278 = scalar_lea.sflag [#allocation8], %s277
          %s279 = sand.u32 %s81, 1
          %s280 = smul.addr %s279, 144
          %s281 = scalar_lea.vmem [#allocation7], %s280
          %s282 = sadd.s32 %s28, 1
          %s283 = smul.u32 9, %s282
          %s285 = ssub.s32 2304, 2304
          %286 = vsyncadd %s278, %s285
          %s287 = smul.addr %s27, 72
          %s288 = sadd.s32 %s283, %s287
          %s289 = smul.addr %s288, 64
          %s290 = scalar_lea.hbm %s1, %s289
          %s292 = sshll.u32 1, 14
          %s293 = sxor.u32 4294967295, %s292
          %s295 = sld [smem:[#allocation0]]
          %s296 = sadd.s32 2, %s295
          %s298 = sshll.u32 7, 26
          %s299 = sxor.u32 4294967295, %s298
          %s300 = sand.u32 0, %s299
          %s301 = sshll.u32 %s296, 26
          %s302 = sor.u32 %s300, %s301
          %s303 = sshll.u32 %s281, 4
          %s304 = int_to_ptr.vmem [resolvable:$true] %s303
          %310 = sst [smem:[#allocation16]] 1152
          %s311 = scalar_lea.smem [#allocation16], 1
          %312 = sst [smem:[%s311]] 576
          %s313 = scalar_lea.smem [#allocation16], 2
          %314 = sst [smem:[%s313]] 9
          %s315 = scalar_lea.smem [#allocation16], 3
          %316 = sst [smem:[%s315]] 64
          %s317 = scalar_lea.smem [#allocation16], 4
          %318 = sst [smem:[%s317]] 64
          %s319 = scalar_lea.smem [#allocation16], 5
          %320 = sst [smem:[%s319]] 4
          %322 = dma.general %s290, 2304, %s304, %s278, [#allocation15], [#allocation16], %s302, 0
        $region32: #{downsample_forward.1} parent=23 // pred_fallthru
          _
      $region24: #{downsample_forward.1} parent=5 // pred_fallthru
        _
      %p323 = scmp.le.s32.totalorder 1, %s20
      %p324 = scmp.lt.s32.totalorder %s20, 3
      %p325 = pnand %p323, %p324
      %p326 = pneg %p325
      // Predicated region
      $region33: #{downsample_forward.1} parent=5 // pred_check
        _
      $region34: #{downsample_forward.1} parent=5 // pred_check_branch
        %328 = sbr.rel (%p325) target = $region36
      $region35: #{downsample_forward.1} parent=5 // pred_region
        %s329 = ssub.s32 %s20, 1
        %s330 = sand.u32 %s54, 1
        %s331 = scalar_lea.sflag [#allocation5], %s330
        %s332 = sand.u32 %s54, 1
        %s333 = smul.addr %s332, 144
        %s334 = scalar_lea.vmem [#allocation4], %s333
        // Predicated region
        $region37: #{downsample_forward.1} parent=35 // pred_check
          %p335 = pneg %p67
        $region38: #{downsample_forward.1} parent=35 // pred_check_branch
          %337 = sbr.rel (%p335) target = $region40
        $region39: #{downsample_forward.1} parent=35 // pred_region
          %338 = dma.done %s331, 2304
        $region40: #{downsample_forward.1} parent=35 // pred_fallthru
          _
        %s339 = sand.u32 %s25, 1
        %s340 = scalar_lea.sflag [#allocation8], %s339
        %s341 = sand.u32 %s84, 1
        %s342 = smul.addr %s341, 144
        %s343 = scalar_lea.vmem [#allocation7], %s342
        // Predicated region
        $region41: #{downsample_forward.1} parent=35 // pred_check
          %p344 = pneg %p97
        $region42: #{downsample_forward.1} parent=35 // pred_check_branch
          %346 = sbr.rel (%p344) target = $region44
        $region43: #{downsample_forward.1} parent=35 // pred_region
          %347 = dma.done %s340, 2304
        $region44: #{downsample_forward.1} parent=35 // pred_fallthru
          _
        // Predicated region
        $region45: #{downsample_forward.1} parent=35 // pred_check
          %p348 = pneg %p123
        $region46: #{downsample_forward.1} parent=35 // pred_check_branch
          %350 = sbr.rel (%p348) target = $region48
        $region47: #{downsample_forward.1} parent=35 // pred_region
          %351 = dma.done [#allocation8], 288
        $region48: #{downsample_forward.1} parent=35 // pred_fallthru
          _
        // Predicated region
        $region49: #{downsample_forward.1} parent=35 // pred_check
          %p352 = pneg %p149
        $region50: #{downsample_forward.1} parent=35 // pred_check_branch
          %354 = sbr.rel (%p352) target = $region52
        $region51: #{downsample_forward.1} parent=35 // pred_region
          %355 = dma.done [#allocation11], 16
        $region52: #{downsample_forward.1} parent=35 // pred_fallthru
          _
        %s356 = sand.u32 %s54, 1
        %s357 = scalar_lea.sflag [#allocation5], %s356
        %s358 = sand.u32 %s54, 1
        %s359 = smul.addr %s358, 144
        %s360 = scalar_lea.vmem [#allocation4], %s359
        %p361 = pneg %p67
        %p362 = pneg %p64
        %s363 = sand.u32 %s25, 1
        %s364 = scalar_lea.sflag [#allocation8], %s363
        %s365 = sand.u32 %s84, 1
        %s366 = smul.addr %s365, 144
        %s367 = scalar_lea.vmem [#allocation7], %s366
        %p368 = pneg %p97
        %p369 = pneg %p94
        %p370 = pneg %p123
        %p371 = pneg %p120
        %p372 = pneg %p149
        %p373 = pneg %p146
        %p374 = pneg %p179
        %p375 = pneg %p176
        %s376 = sand.u32 %s166, 1
        %s377 = scalar_lea.sflag [#allocation6], %s376
        %s378 = sand.u32 %s166, 1
        %s379 = smul.addr %s378, 72
        %s380 = scalar_lea.vmem [#allocation12], %s379
        %s381 = smul.u32 9, %s31
        %s382 = sadd.s32 %s31, 1
        %s383 = smul.u32 9, %s382
        %s384 = smul.u32 9, %s31
        %v386 = vld [vmem:[%s334] sm:$0xf]
        %v387 = vld [vmem:[%s334 + $0x4] sm:$0xf]
        %v388 = vld [vmem:[%s334 + $0x8] sm:$0xf]
        %v389 = vld [vmem:[%s334 + $0xc] sm:$0xf]
        %v390 = vld [vmem:[%s334 + $0x10] sm:$0xf]
        %v391 = vld [vmem:[%s334 + $0x14] sm:$0xf]
        %v392 = vld [vmem:[%s334 + $0x18] sm:$0xf]
        %v393 = vld [vmem:[%s334 + $0x1c] sm:$0xf]
        %v394 = vld [vmem:[%s334 + $0x20] sm:$0xf]
        %v395 = vld [vmem:[%s334 + $0x24] sm:$0xf]
        %v396 = vld [vmem:[%s334 + $0x28] sm:$0xf]
        %v397 = vld [vmem:[%s334 + $0x2c] sm:$0xf]
        %v398 = vld [vmem:[%s334 + $0x30] sm:$0xf]
        %v399 = vld [vmem:[%s334 + $0x34] sm:$0xf]
        %v400 = vld [vmem:[%s334 + $0x38] sm:$0xf]
        %v401 = vld [vmem:[%s334 + $0x3c] sm:$0xf]
        %v402 = vld [vmem:[%s334 + $0x40] sm:$0xf]
        %v403 = vld [vmem:[%s334 + $0x44] sm:$0xf]
        %v404 = vld [vmem:[%s334 + $0x48] sm:$0xf]
        %v405 = vld [vmem:[%s334 + $0x4c] sm:$0xf]
        %v406 = vld [vmem:[%s334 + $0x50] sm:$0xf]
        %v407 = vld [vmem:[%s334 + $0x54] sm:$0xf]
        %v408 = vld [vmem:[%s334 + $0x58] sm:$0xf]
        %v409 = vld [vmem:[%s334 + $0x5c] sm:$0xf]
        %v410 = vld [vmem:[%s334 + $0x60] sm:$0xf]
        %v411 = vld [vmem:[%s334 + $0x64] sm:$0xf]
        %v412 = vld [vmem:[%s334 + $0x68] sm:$0xf]
        %v413 = vld [vmem:[%s334 + $0x6c] sm:$0xf]
        %v414 = vld [vmem:[%s334 + $0x70] sm:$0xf]
        %v415 = vld [vmem:[%s334 + $0x74] sm:$0xf]
        %v416 = vld [vmem:[%s334 + $0x78] sm:$0xf]
        %v417 = vld [vmem:[%s334 + $0x7c] sm:$0xf]
        %v418 = vld [vmem:[%s334 + $0x80] sm:$0xf]
        %v419 = vld [vmem:[%s334 + $0x84] sm:$0xf]
        %v420 = vld [vmem:[%s334 + $0x88] sm:$0xf]
        %v421 = vld [vmem:[%s334 + $0x8c] sm:$0xf]
        %v422 = vunpack.c.l.bf16 %v386
        %v423 = vunpack.c.l.bf16 %v387
        %v424 = vunpack.c.l.bf16 %v388
        %v425 = vunpack.c.l.bf16 %v389
        %v426 = vunpack.c.l.bf16 %v390
        %v427 = vunpack.c.l.bf16 %v391
        %v428 = vunpack.c.l.bf16 %v392
        %v429 = vunpack.c.l.bf16 %v393
        %v430 = vunpack.c.l.bf16 %v394
        %v431 = vunpack.c.l.bf16 %v395
        %v432 = vunpack.c.l.bf16 %v396
        %v433 = vunpack.c.l.bf16 %v397
        %v434 = vunpack.c.l.bf16 %v398
        %v435 = vunpack.c.l.bf16 %v399
        %v436 = vunpack.c.l.bf16 %v400
        %v437 = vunpack.c.l.bf16 %v401
        %v438 = vunpack.c.l.bf16 %v402
        %v439 = vunpack.c.l.bf16 %v403
        %v440 = vunpack.c.l.bf16 %v404
        %v441 = vunpack.c.l.bf16 %v405
        %v442 = vunpack.c.l.bf16 %v406
        %v443 = vunpack.c.l.bf16 %v407
        %v444 = vunpack.c.l.bf16 %v408
        %v445 = vunpack.c.l.bf16 %v409
        %v446 = vunpack.c.l.bf16 %v410
        %v447 = vunpack.c.l.bf16 %v411
        %v448 = vunpack.c.l.bf16 %v412
        %v449 = vunpack.c.l.bf16 %v413
        %v450 = vunpack.c.l.bf16 %v414
        %v451 = vunpack.c.l.bf16 %v415
        %v452 = vunpack.c.l.bf16 %v416
        %v453 = vunpack.c.l.bf16 %v417
        %v454 = vunpack.c.l.bf16 %v418
        %v455 = vunpack.c.l.bf16 %v419
        %v456 = vunpack.c.l.bf16 %v420
        %v457 = vunpack.c.l.bf16 %v421
        %vm458 = vcmask 31744
        %459 = vst.msk [vmem:[#allocation2] sm:$0xff] %vm458, %v422
        %460 = vst.msk [vmem:[#allocation2 + $0x8] sm:$0xff] %vm458, %v423
        %461 = vst.msk [vmem:[#allocation2 + $0x10] sm:$0xff] %vm458, %v424
        %462 = vst.msk [vmem:[#allocation2 + $0x18] sm:$0xff] %vm458, %v425
        %463 = vst.msk [vmem:[#allocation2 + $0x20] sm:$0xff] %vm458, %v426
        %464 = vst.msk [vmem:[#allocation2 + $0x28] sm:$0xff] %vm458, %v427
        %465 = vst.msk [vmem:[#allocation2 + $0x30] sm:$0xff] %vm458, %v428
        %466 = vst.msk [vmem:[#allocation2 + $0x38] sm:$0xff] %vm458, %v429
        %467 = vst.msk [vmem:[#allocation2 + $0x40] sm:$0xff] %vm458, %v430
        %468 = vst.msk [vmem:[#allocation2 + $0x58] sm:$0xff] %vm458, %v431
        %469 = vst.msk [vmem:[#allocation2 + $0x60] sm:$0xff] %vm458, %v432
        %470 = vst.msk [vmem:[#allocation2 + $0x68] sm:$0xff] %vm458, %v433
        %471 = vst.msk [vmem:[#allocation2 + $0x70] sm:$0xff] %vm458, %v434
        %472 = vst.msk [vmem:[#allocation2 + $0x78] sm:$0xff] %vm458, %v435
        %473 = vst.msk [vmem:[#allocation2 + $0x80] sm:$0xff] %vm458, %v436
        %474 = vst.msk [vmem:[#allocation2 + $0x88] sm:$0xff] %vm458, %v437
        %475 = vst.msk [vmem:[#allocation2 + $0x90] sm:$0xff] %vm458, %v438
        %476 = vst.msk [vmem:[#allocation2 + $0x98] sm:$0xff] %vm458, %v439
        %477 = vst.msk [vmem:[#allocation2 + $0xb0] sm:$0xff] %vm458, %v440
        %478 = vst.msk [vmem:[#allocation2 + $0xb8] sm:$0xff] %vm458, %v441
        %479 = vst.msk [vmem:[#allocation2 + $0xc0] sm:$0xff] %vm458, %v442
        %480 = vst.msk [vmem:[#allocation2 + $0xc8] sm:$0xff] %vm458, %v443
        %481 = vst.msk [vmem:[#allocation2 + $0xd0] sm:$0xff] %vm458, %v444
        %482 = vst.msk [vmem:[#allocation2 + $0xd8] sm:$0xff] %vm458, %v445
        %483 = vst.msk [vmem:[#allocation2 + $0xe0] sm:$0xff] %vm458, %v446
        %484 = vst.msk [vmem:[#allocation2 + $0xe8] sm:$0xff] %vm458, %v447
        %485 = vst.msk [vmem:[#allocation2 + $0xf0] sm:$0xff] %vm458, %v448
        %486 = vst.msk [vmem:[#allocation2 + $0x108] sm:$0xff] %vm458, %v449
        %487 = vst.msk [vmem:[#allocation2 + $0x110] sm:$0xff] %vm458, %v450
        %488 = vst.msk [vmem:[#allocation2 + $0x118] sm:$0xff] %vm458, %v451
        %489 = vst.msk [vmem:[#allocation2 + $0x120] sm:$0xff] %vm458, %v452
        %490 = vst.msk [vmem:[#allocation2 + $0x128] sm:$0xff] %vm458, %v453
        %491 = vst.msk [vmem:[#allocation2 + $0x130] sm:$0xff] %vm458, %v454
        %492 = vst.msk [vmem:[#allocation2 + $0x138] sm:$0xff] %vm458, %v455
        %493 = vst.msk [vmem:[#allocation2 + $0x140] sm:$0xff] %vm458, %v456
        %494 = vst.msk [vmem:[#allocation2 + $0x148] sm:$0xff] %vm458, %v457
        %v495 = vld [vmem:[%s343] sm:$0xf]
        %v496 = vld [vmem:[%s343 + $0x4] sm:$0xf]
        %v497 = vld [vmem:[%s343 + $0x24] sm:$0xf]
        %v498 = vld [vmem:[%s343 + $0x28] sm:$0xf]
        %v499 = vld [vmem:[%s343 + $0x48] sm:$0xf]
        %v500 = vld [vmem:[%s343 + $0x4c] sm:$0xf]
        %v501 = vld [vmem:[%s343 + $0x6c] sm:$0xf]
        %v502 = vld [vmem:[%s343 + $0x70] sm:$0xf]
        %v503 = vunpack.c.l.bf16 %v495
        %v504 = vunpack.c.l.bf16 %v496
        %v505 = vunpack.c.l.bf16 %v497
        %v506 = vunpack.c.l.bf16 %v498
        %v507 = vunpack.c.l.bf16 %v499
        %v508 = vunpack.c.l.bf16 %v500
        %v509 = vunpack.c.l.bf16 %v501
        %v510 = vunpack.c.l.bf16 %v502
        %511 = vst.msk [vmem:[#allocation2 + $0x48] sm:$0xff] %vm458, %v503
        %512 = vst.msk [vmem:[#allocation2 + $0x50] sm:$0xff] %vm458, %v504
        %513 = vst.msk [vmem:[#allocation2 + $0xa0] sm:$0xff] %vm458, %v505
        %514 = vst.msk [vmem:[#allocation2 + $0xa8] sm:$0xff] %vm458, %v506
        %515 = vst.msk [vmem:[#allocation2 + $0xf8] sm:$0xff] %vm458, %v507
        %516 = vst.msk [vmem:[#allocation2 + $0x100] sm:$0xff] %vm458, %v508
        %517 = vst.msk [vmem:[#allocation2 + $0x150] sm:$0xff] %vm458, %v509
        %518 = vst.msk [vmem:[#allocation2 + $0x158] sm:$0xff] %vm458, %v510
        %v519 = vld [vmem:[#allocation2] sm:$0xff]
        %v520 = vld [vmem:[#allocation2 + $0x8] sm:$0xff]
        %v521 = vld [vmem:[#allocation2 + $0x10] sm:$0xff]
        %v522 = vld [vmem:[#allocation2 + $0x18] sm:$0xff]
        %v523 = vld [vmem:[#allocation2 + $0x20] sm:$0xff]
        %v524 = vld [vmem:[#allocation2 + $0x28] sm:$0xff]
        %v525 = vld [vmem:[#allocation2 + $0x30] sm:$0xff]
        %v526 = vld [vmem:[#allocation2 + $0x38] sm:$0xff]
        %v527 = vld [vmem:[#allocation2 + $0x40] sm:$0xff]
        %v528 = vpack.c.bf16 %v520, %v519
        %v529 = vpack.c.bf16 %v522, %v521
        %v530 = vpack.c.bf16 %v524, %v523
        %v531 = vpack.c.bf16 %v526, %v525
        %v532 = vpack.c.bf16 %v527, %v527
        %v533 = vld [vmem:[#allocation9] sm:$0x3]
        %v535 = vsel %vm458, %v528, 0
        %v538 = vsel %vm458, %v529, 0
        %v541 = vsel %vm458, %v530, 0
        %v544 = vsel %vm458, %v531, 0
        %v547 = vsel %vm458, %v532, 0
        %vm549 = vcmask 1041408
        %v551 = vsel %vm549, %v533, 0
        %553 = vmatprep.subr.bf16.mxu0 0
        %554 = vmatpush1.bf16.msra.mxu0 %v551
        %555 = vmatprep.subr.bf16.mxu0 0
        %556 = vmatpush1.bf16.msra.mxu0 0
        %557 = vmatprep.subr.bf16.mxu0 0
        %558 = vmatpush1.bf16.msra.mxu0 0
        %559 = vmatprep.subr.bf16.mxu0 0
        %560 = vmatpush1.bf16.msra.mxu0 0
        %561 = vmatprep.subr.bf16.mxu0 0
        %562 = vmatpush1.bf16.msra.mxu0 0
        %563 = vmatprep.subr.bf16.mxu0 0
        %564 = vmatpush1.bf16.msra.mxu0 0
        %565 = vmatprep.subr.bf16.mxu0 0
        %566 = vmatpush1.bf16.msra.mxu0 0
        %567 = vmatprep.subr.bf16.mxu0 0
        %568 = vmatpush1.bf16.msra.mxu0 0
        %569 = vmatprep.subr.bf16.mxu0 0
        %570 = vmatpush1.bf16.msra.mxu0 0
        %571 = vmatprep.subr.bf16.mxu0 0
        %572 = vmatpush1.bf16.msra.mxu0 0
        %573 = vmatprep.subr.bf16.mxu0 0
        %574 = vmatpush1.bf16.msra.mxu0 0
        %575 = vmatprep.subr.bf16.mxu0 0
        %576 = vmatpush1.bf16.msra.mxu0 0
        %577 = vmatprep.subr.bf16.mxu0 0
        %578 = vmatpush1.bf16.msra.mxu0 0
        %579 = vmatprep.subr.bf16.mxu0 0
        %580 = vmatpush1.bf16.msra.mxu0 0
        %581 = vmatprep.subr.bf16.mxu0 0
        %582 = vmatpush1.bf16.msra.mxu0 0
        %583 = vmatprep.subr.bf16.mxu0 0
        %584 = vmatpush1.bf16.msra.mxu0 0
        %585 = vmatprep.mubr.bf16.mxu0 0
        %586 = vmatmul.mubr.bf16.gmra.mrb[0].mxu0 %v535
        %v587 = vpop.f32.mrb[0].mxu0
        %v588 = vadd.f32 0.0, %v587
        %v589 = vpop.f32.mrb[0].mxu0
        %v590 = vpop.f32.mrb[0].mxu0
        %v591 = vadd.f32 0.0, %v590
        %v592 = vpop.f32.mrb[0].mxu0
        %593 = vmatprep.mubr.bf16.mxu0 0
        %594 = vmatmul.mubr.bf16.gmra.mrb[0].mxu0 %v538
        %v595 = vpop.f32.mrb[0].mxu0
        %v596 = vadd.f32 0.0, %v595
        %v597 = vpop.f32.mrb[0].mxu0
        %v598 = vpop.f32.mrb[0].mxu0
        %v599 = vadd.f32 0.0, %v598
        %v600 = vpop.f32.mrb[0].mxu0
        %601 = vmatprep.mubr.bf16.mxu0 0
        %602 = vmatmul.mubr.bf16.gmra.mrb[0].mxu0 %v541
        %v603 = vpop.f32.mrb[0].mxu0
        %v604 = vadd.f32 0.0, %v603
        %v605 = vpop.f32.mrb[0].mxu0
        %v606 = vpop.f32.mrb[0].mxu0
        %v607 = vadd.f32 0.0, %v606
        %v608 = vpop.f32.mrb[0].mxu0
        %609 = vmatprep.mubr.bf16.mxu0 0
        %610 = vmatmul.mubr.bf16.gmra.mrb[0].mxu0 %v544
        %v611 = vpop.f32.mrb[0].mxu0
        %v612 = vadd.f32 0.0, %v611
        %v613 = vpop.f32.mrb[0].mxu0
        %v614 = vpop.f32.mrb[0].mxu0
        %v615 = vadd.f32 0.0, %v614
        %v616 = vpop.f32.mrb[0].mxu0
        %617 = vmatprep.mubr.bf16.mxu0 0
        %618 = vmatmul.mubr.bf16.gmra.mrb[0].mxu0 %v547
        %v619 = vpop.f32.mrb[0].mxu0
        %v620 = vadd.f32 0.0, %v619
        %v621 = vpop.f32.mrb[0].mxu0
        %v622 = vpop.f32.mrb[0].mxu0
        %v623 = vpop.f32.mrb[0].mxu0
        %624 = vdwg.mxu0
        %625 = vst [vmem:[#allocation3] sm:$0xff] %v588
        %626 = vst [vmem:[#allocation3 + $0x8] sm:$0xff] %v591
        %627 = vst [vmem:[#allocation3 + $0x10] sm:$0xff] %v596
        %628 = vst [vmem:[#allocation3 + $0x18] sm:$0xff] %v599
        %629 = vst [vmem:[#allocation3 + $0x20] sm:$0xff] %v604
        %630 = vst [vmem:[#allocation3 + $0x28] sm:$0xff] %v607
        %631 = vst [vmem:[#allocation3 + $0x30] sm:$0xff] %v612
        %632 = vst [vmem:[#allocation3 + $0x38] sm:$0xff] %v615
        %633 = vst [vmem:[#allocation3 + $0x40] sm:$0xff] %v620
        %s634 = scalar_lea.vmem [#allocation2], 88
        %v635 = vld [vmem:[%s634] sm:$0xff]
        %v636 = vld [vmem:[%s634 + $0x8] sm:$0xff]
        %v637 = vld [vmem:[%s634 + $0x10] sm:$0xff]
        %v638 = vld [vmem:[%s634 + $0x18] sm:$0xff]
        %v639 = vld [vmem:[%s634 + $0x20] sm:$0xff]
        %v640 = vld [vmem:[%s634 + $0x28] sm:$0xff]
        %v641 = vld [vmem:[%s634 + $0x30] sm:$0xff]
        %v642 = vld [vmem:[%s634 + $0x38] sm:$0xff]
        %v643 = vld [vmem:[%s634 + $0x40] sm:$0xff]
        %v644 = vpack.c.bf16 %v636, %v635
        %v645 = vpack.c.bf16 %v638, %v637
        %v646 = vpack.c.bf16 %v640, %v639
        %v647 = vpack.c.bf16 %v642, %v641
        %v648 = vpack.c.bf16 %v643, %v643
        %s649 = scalar_lea.vmem [#allocation9], 2
        %v650 = vld [vmem:[%s649] sm:$0x3]
        %v652 = vsel %vm458, %v644, 0
        %v655 = vsel %vm458, %v645, 0
        %v658 = vsel %vm458, %v646, 0
        %v661 = vsel %vm458, %v647, 0
        %v664 = vsel %vm458, %v648, 0
        %v667 = vsel %vm549, %v650, 0
        %669 = vmatprep.subr.bf16.mxu0 0
        %670 = vmatpush1.bf16.msra.mxu0 %v667
        %671 = vmatprep.subr.bf16.mxu0 0
        %672 = vmatpush1.bf16.msra.mxu0 0
        %673 = vmatprep.subr.bf16.mxu0 0
        %674 = vmatpush1.bf16.msra.mxu0 0
        %675 = vmatprep.subr.bf16.mxu0 0
        %676 = vmatpush1.bf16.msra.mxu0 0
        %677 = vmatprep.subr.bf16.mxu0 0
        %678 = vmatpush1.bf16.msra.mxu0 0
        %679 = vmatprep.subr.bf16.mxu0 0
        %680 = vmatpush1.bf16.msra.mxu0 0
        %681 = vmatprep.subr.bf16.mxu0 0
        %682 = vmatpush1.bf16.msra.mxu0 0
        %683 = vmatprep.subr.bf16.mxu0 0
        %684 = vmatpush1.bf16.msra.mxu0 0
        %685 = vmatprep.subr.bf16.mxu0 0
        %686 = vmatpush1.bf16.msra.mxu0 0
        %687 = vmatprep.subr.bf16.mxu0 0
        %688 = vmatpush1.bf16.msra.mxu0 0
        %689 = vmatprep.subr.bf16.mxu0 0
        %690 = vmatpush1.bf16.msra.mxu0 0
        %691 = vmatprep.subr.bf16.mxu0 0
        %692 = vmatpush1.bf16.msra.mxu0 0
        %693 = vmatprep.subr.bf16.mxu0 0
        %694 = vmatpush1.bf16.msra.mxu0 0
        %695 = vmatprep.subr.bf16.mxu0 0
        %696 = vmatpush1.bf16.msra.mxu0 0
        %697 = vmatprep.subr.bf16.mxu0 0
        %698 = vmatpush1.bf16.msra.mxu0 0
        %699 = vmatprep.subr.bf16.mxu0 0
        %700 = vmatpush1.bf16.msra.mxu0 0
        %701 = vmatprep.mubr.bf16.mxu0 0
        %702 = vmatmul.mubr.bf16.gmra.mrb[0].mxu0 %v652
        %v703 = vpop.f32.mrb[0].mxu0
        %v704 = vadd.f32 0.0, %v703
        %v705 = vpop.f32.mrb[0].mxu0
        %v706 = vpop.f32.mrb[0].mxu0
        %v707 = vadd.f32 0.0, %v706
        %v708 = vpop.f32.mrb[0].mxu0
        %709 = vmatprep.mubr.bf16.mxu0 0
        %710 = vmatmul.mubr.bf16.gmra.mrb[0].mxu0 %v655
        %v711 = vpop.f32.mrb[0].mxu0
        %v712 = vadd.f32 0.0, %v711
        %v713 = vpop.f32.mrb[0].mxu0
        %v714 = vpop.f32.mrb[0].mxu0
        %v715 = vadd.f32 0.0, %v714
        %v716 = vpop.f32.mrb[0].mxu0
        %717 = vmatprep.mubr.bf16.mxu0 0
        %718 = vmatmul.mubr.bf16.gmra.mrb[0].mxu0 %v658
        %v719 = vpop.f32.mrb[0].mxu0
        %v720 = vadd.f32 0.0, %v719
        %v721 = vpop.f32.mrb[0].mxu0
        %v722 = vpop.f32.mrb[0].mxu0
        %v723 = vadd.f32 0.0, %v722
        %v724 = vpop.f32.mrb[0].mxu0
        %725 = vmatprep.mubr.bf16.mxu0 0
        %726 = vmatmul.mubr.bf16.gmra.mrb[0].mxu0 %v661
        %v727 = vpop.f32.mrb[0].mxu0
        %v728 = vadd.f32 0.0, %v727
        %v729 = vpop.f32.mrb[0].mxu0
        %v730 = vpop.f32.mrb[0].mxu0
        %v731 = vadd.f32 0.0, %v730
        %v732 = vpop.f32.mrb[0].mxu0
        %733 = vmatprep.mubr.bf16.mxu0 0
        %734 = vmatmul.mubr.bf16.gmra.mrb[0].mxu0 %v664
        %v735 = vpop.f32.mrb[0].mxu0
        %v736 = vadd.f32 0.0, %v735
        %v737 = vpop.f32.mrb[0].mxu0
        %v738 = vpop.f32.mrb[0].mxu0
        %v739 = vpop.f32.mrb[0].mxu0
        %740 = vdwg.mxu0
        %v741 = vld [vmem:[#allocation3] sm:$0xff]
        %v742 = vld [vmem:[#allocation3 + $0x8] sm:$0xff]
        %v743 = vld [vmem:[#allocation3 + $0x10] sm:$0xff]
        %v744 = vld [vmem:[#allocation3 + $0x18] sm:$0xff]
        %v745 = vld [vmem:[#allocation3 + $0x20] sm:$0xff]
        %v746 = vld [vmem:[#allocation3 + $0x28] sm:$0xff]
        %v747 = vld [vmem:[#allocation3 + $0x30] sm:$0xff]
        %v748 = vld [vmem:[#allocation3 + $0x38] sm:$0xff]
        %v749 = vld [vmem:[#allocation3 + $0x40] sm:$0xff]
        %v750 = vadd.f32 %v741, %v704
        %v751 = vadd.f32 %v742, %v707
        %v752 = vadd.f32 %v743, %v712
        %v753 = vadd.f32 %v744, %v715
        %v754 = vadd.f32 %v745, %v720
        %v755 = vadd.f32 %v746, %v723
        %v756 = vadd.f32 %v747, %v728
        %v757 = vadd.f32 %v748, %v731
        %v758 = vadd.f32 %v749, %v736
        %759 = vst [vmem:[#allocation3] sm:$0xff] %v750
        %760 = vst [vmem:[#allocation3 + $0x8] sm:$0xff] %v751
        %761 = vst [vmem:[#allocation3 + $0x10] sm:$0xff] %v752
        %762 = vst [vmem:[#allocation3 + $0x18] sm:$0xff] %v753
        %763 = vst [vmem:[#allocation3 + $0x20] sm:$0xff] %v754
        %764 = vst [vmem:[#allocation3 + $0x28] sm:$0xff] %v755
        %765 = vst [vmem:[#allocation3 + $0x30] sm:$0xff] %v756
        %766 = vst [vmem:[#allocation3 + $0x38] sm:$0xff] %v757
        %767 = vst [vmem:[#allocation3 + $0x40] sm:$0xff] %v758
        %v768 = vld [vmem:[#allocation2 + $0x1] sm:$0xff]
        %v769 = vld [vmem:[#allocation2 + $0x9] sm:$0xff]
        %v770 = vld [vmem:[#allocation2 + $0x11] sm:$0xff]
        %v771 = vld [vmem:[#allocation2 + $0x19] sm:$0xff]
        %v772 = vld [vmem:[#allocation2 + $0x21] sm:$0xff]
        %v773 = vld [vmem:[#allocation2 + $0x29] sm:$0xff]
        %v774 = vld [vmem:[#allocation2 + $0x31] sm:$0xff]
        %v775 = vld [vmem:[#allocation2 + $0x39] sm:$0xff]
        %v776 = vld [vmem:[#allocation2 + $0x41] sm:$0xff]
        %v777 = vpack.c.bf16 %v769, %v768
        %v778 = vpack.c.bf16 %v771, %v770
        %v779 = vpack.c.bf16 %v773, %v772
        %v780 = vpack.c.bf16 %v775, %v774
        %v781 = vpack.c.bf16 %v776, %v776
        %s782 = scalar_lea.vmem [#allocation9], 4
        %v783 = vld [vmem:[%s782] sm:$0x3]
        %v785 = vsel %vm458, %v777, 0
        %v788 = vsel %vm458, %v778, 0
        %v791 = vsel %vm458, %v779, 0
        %v794 = vsel %vm458, %v780, 0
        %v797 = vsel %vm458, %v781, 0
        %v800 = vsel %vm549, %v783, 0
        %802 = vmatprep.subr.bf16.mxu0 0
        %803 = vmatpush1.bf16.msra.mxu0 %v800
        %804 = vmatprep.subr.bf16.mxu0 0
        %805 = vmatpush1.bf16.msra.mxu0 0
        %806 = vmatprep.subr.bf16.mxu0 0
        %807 = vmatpush1.bf16.msra.mxu0 0
        %808 = vmatprep.subr.bf16.mxu0 0
        %809 = vmatpush1.bf16.msra.mxu0 0
        %810 = vmatprep.subr.bf16.mxu0 0
        %811 = vmatpush1.bf16.msra.mxu0 0
        %812 = vmatprep.subr.bf16.mxu0 0
        %813 = vmatpush1.bf16.msra.mxu0 0
        %814 = vmatprep.subr.bf16.mxu0 0
        %815 = vmatpush1.bf16.msra.mxu0 0
        %816 = vmatprep.subr.bf16.mxu0 0
        %817 = vmatpush1.bf16.msra.mxu0 0
        %818 = vmatprep.subr.bf16.mxu0 0
        %819 = vmatpush1.bf16.msra.mxu0 0
        %820 = vmatprep.subr.bf16.mxu0 0
        %821 = vmatpush1.bf16.msra.mxu0 0
        %822 = vmatprep.subr.bf16.mxu0 0
        %823 = vmatpush1.bf16.msra.mxu0 0
        %824 = vmatprep.subr.bf16.mxu0 0
        %825 = vmatpush1.bf16.msra.mxu0 0
        %826 = vmatprep.subr.bf16.mxu0 0
        %827 = vmatpush1.bf16.msra.mxu0 0
        %828 = vmatprep.subr.bf16.mxu0 0
        %829 = vmatpush1.bf16.msra.mxu0 0
        %830 = vmatprep.subr.bf16.mxu0 0
        %831 = vmatpush1.bf16.msra.mxu0 0
        %832 = vmatprep.subr.bf16.mxu0 0
        %833 = vmatpush1.bf16.msra.mxu0 0
        %834 = vmatprep.mubr.bf16.mxu0 0
        %835 = vmatmul.mubr.bf16.gmra.mrb[0].mxu0 %v785
        %v836 = vpop.f32.mrb[0].mxu0
        %v837 = vadd.f32 0.0, %v836
        %v838 = vpop.f32.mrb[0].mxu0
        %v839 = vpop.f32.mrb[0].mxu0
        %v840 = vadd.f32 0.0, %v839
        %v841 = vpop.f32.mrb[0].mxu0
        %842 = vmatprep.mubr.bf16.mxu0 0
        %843 = vmatmul.mubr.bf16.gmra.mrb[0].mxu0 %v788
        %v844 = vpop.f32.mrb[0].mxu0
        %v845 = vadd.f32 0.0, %v844
        %v846 = vpop.f32.mrb[0].mxu0
        %v847 = vpop.f32.mrb[0].mxu0
        %v848 = vadd.f32 0.0, %v847
        %v849 = vpop.f32.mrb[0].mxu0
        %850 = vmatprep.mubr.bf16.mxu0 0
        %851 = vmatmul.mubr.bf16.gmra.mrb[0].mxu0 %v791
        %v852 = vpop.f32.mrb[0].mxu0
        %v853 = vadd.f32 0.0, %v852
        %v854 = vpop.f32.mrb[0].mxu0
        %v855 = vpop.f32.mrb[0].mxu0
        %v856 = vadd.f32 0.0, %v855
        %v857 = vpop.f32.mrb[0].mxu0
        %858 = vmatprep.mubr.bf16.mxu0 0
        %859 = vmatmul.mubr.bf16.gmra.mrb[0].mxu0 %v794
        %v860 = vpop.f32.mrb[0].mxu0
        %v861 = vadd.f32 0.0, %v860
        %v862 = vpop.f32.mrb[0].mxu0
        %v863 = vpop.f32.mrb[0].mxu0
        %v864 = vadd.f32 0.0, %v863
        %v865 = vpop.f32.mrb[0].mxu0
        %866 = vmatprep.mubr.bf16.mxu0 0
        %867 = vmatmul.mubr.bf16.gmra.mrb[0].mxu0 %v797
        %v868 = vpop.f32.mrb[0].mxu0
        %v869 = vadd.f32 0.0, %v868
        %v870 = vpop.f32.mrb[0].mxu0
        %v871 = vpop.f32.mrb[0].mxu0
        %v872 = vpop.f32.mrb[0].mxu0
        %873 = vdwg.mxu0
        %v874 = vld [vmem:[#allocation3] sm:$0xff]
        %v875 = vld [vmem:[#allocation3 + $0x8] sm:$0xff]
        %v876 = vld [vmem:[#allocation3 + $0x10] sm:$0xff]
        %v877 = vld [vmem:[#allocation3 + $0x18] sm:$0xff]
        %v878 = vld [vmem:[#allocation3 + $0x20] sm:$0xff]
        %v879 = vld [vmem:[#allocation3 + $0x28] sm:$0xff]
        %v880 = vld [vmem:[#allocation3 + $0x30] sm:$0xff]
        %v881 = vld [vmem:[#allocation3 + $0x38] sm:$0xff]
        %v882 = vld [vmem:[#allocation3 + $0x40] sm:$0xff]
        %v883 = vadd.f32 %v874, %v837
        %v884 = vadd.f32 %v875, %v840
        %v885 = vadd.f32 %v876, %v845
        %v886 = vadd.f32 %v877, %v848
        %v887 = vadd.f32 %v878, %v853
        %v888 = vadd.f32 %v879, %v856
        %v889 = vadd.f32 %v880, %v861
        %v890 = vadd.f32 %v881, %v864
        %v891 = vadd.f32 %v882, %v869
        %892 = vst [vmem:[#allocation3] sm:$0xff] %v883
        %893 = vst [vmem:[#allocation3 + $0x8] sm:$0xff] %v884
        %894 = vst [vmem:[#allocation3 + $0x10] sm:$0xff] %v885
        %895 = vst [vmem:[#allocation3 + $0x18] sm:$0xff] %v886
        %896 = vst [vmem:[#allocation3 + $0x20] sm:$0xff] %v887
        %897 = vst [vmem:[#allocation3 + $0x28] sm:$0xff] %v888
        %898 = vst [vmem:[#allocation3 + $0x30] sm:$0xff] %v889
        %899 = vst [vmem:[#allocation3 + $0x38] sm:$0xff] %v890
        %900 = vst [vmem:[#allocation3 + $0x40] sm:$0xff] %v891
        %s901 = scalar_lea.vmem [#allocation2], 176
        %v902 = vld [vmem:[%s901] sm:$0xff]
        %v903 = vld [vmem:[%s901 + $0x8] sm:$0xff]
        %v904 = vld [vmem:[%s901 + $0x10] sm:$0xff]
        %v905 = vld [vmem:[%s901 + $0x18] sm:$0xff]
        %v906 = vld [vmem:[%s901 + $0x20] sm:$0xff]
        %v907 = vld [vmem:[%s901 + $0x28] sm:$0xff]
        %v908 = vld [vmem:[%s901 + $0x30] sm:$0xff]
        %v909 = vld [vmem:[%s901 + $0x38] sm:$0xff]
        %v910 = vld [vmem:[%s901 + $0x40] sm:$0xff]
        %v911 = vpack.c.bf16 %v903, %v902
        %v912 = vpack.c.bf16 %v905, %v904
        %v913 = vpack.c.bf16 %v907, %v906
        %v914 = vpack.c.bf16 %v909, %v908
        %v915 = vpack.c.bf16 %v910, %v910
        %s916 = scalar_lea.vmem [#allocation9], 6
        %v917 = vld [vmem:[%s916] sm:$0x3]
        %v919 = vsel %vm458, %v911, 0
        %v922 = vsel %vm458, %v912, 0
        %v925 = vsel %vm458, %v913, 0
        %v928 = vsel %vm458, %v914, 0
        %v931 = vsel %vm458, %v915, 0
        %v934 = vsel %vm549, %v917, 0
        %936 = vmatprep.subr.bf16.mxu0 0
        %937 = vmatpush1.bf16.msra.mxu0 %v934
        %938 = vmatprep.subr.bf16.mxu0 0
        %939 = vmatpush1.bf16.msra.mxu0 0
        %940 = vmatprep.subr.bf16.mxu0 0
        %941 = vmatpush1.bf16.msra.mxu0 0
        %942 = vmatprep.subr.bf16.mxu0 0
        %943 = vmatpush1.bf16.msra.mxu0 0
        %944 = vmatprep.subr.bf16.mxu0 0
        %945 = vmatpush1.bf16.msra.mxu0 0
        %946 = vmatprep.subr.bf16.mxu0 0
        %947 = vmatpush1.bf16.msra.mxu0 0
        %948 = vmatprep.subr.bf16.mxu0 0
        %949 = vmatpush1.bf16.msra.mxu0 0
        %950 = vmatprep.subr.bf16.mxu0 0
        %951 = vmatpush1.bf16.msra.mxu0 0
        %952 = vmatprep.subr.bf16.mxu0 0
        %953 = vmatpush1.bf16.msra.mxu0 0
        %954 = vmatprep.subr.bf16.mxu0 0
        %955 = vmatpush1.bf16.msra.mxu0 0
        %956 = vmatprep.subr.bf16.mxu0 0
        %957 = vmatpush1.bf16.msra.mxu0 0
        %958 = vmatprep.subr.bf16.mxu0 0
        %959 = vmatpush1.bf16.msra.mxu0 0
        %960 = vmatprep.subr.bf16.mxu0 0
        %961 = vmatpush1.bf16.msra.mxu0 0
        %962 = vmatprep.subr.bf16.mxu0 0
        %963 = vmatpush1.bf16.msra.mxu0 0
        %964 = vmatprep.subr.bf16.mxu0 0
        %965 = vmatpush1.bf16.msra.mxu0 0
        %966 = vmatprep.subr.bf16.mxu0 0
        %967 = vmatpush1.bf16.msra.mxu0 0
        %968 = vmatprep.mubr.bf16.mxu0 0
        %969 = vmatmul.mubr.bf16.gmra.mrb[0].mxu0 %v919
        %v970 = vpop.f32.mrb[0].mxu0
        %v971 = vadd.f32 0.0, %v970
        %v972 = vpop.f32.mrb[0].mxu0
        %v973 = vpop.f32.mrb[0].mxu0
        %v974 = vadd.f32 0.0, %v973
        %v975 = vpop.f32.mrb[0].mxu0
        %976 = vmatprep.mubr.bf16.mxu0 0
        %977 = vmatmul.mubr.bf16.gmra.mrb[0].mxu0 %v922
        %v978 = vpop.f32.mrb[0].mxu0
        %v979 = vadd.f32 0.0, %v978
        %v980 = vpop.f32.mrb[0].mxu0
        %v981 = vpop.f32.mrb[0].mxu0
        %v982 = vadd.f32 0.0, %v981
        %v983 = vpop.f32.mrb[0].mxu0
        %984 = vmatprep.mubr.bf16.mxu0 0
        %985 = vmatmul.mubr.bf16.gmra.mrb[0].mxu0 %v925
        %v986 = vpop.f32.mrb[0].mxu0
        %v987 = vadd.f32 0.0, %v986
        %v988 = vpop.f32.mrb[0].mxu0
        %v989 = vpop.f32.mrb[0].mxu0
        %v990 = vadd.f32 0.0, %v989
        %v991 = vpop.f32.mrb[0].mxu0
        %992 = vmatprep.mubr.bf16.mxu0 0
        %993 = vmatmul.mubr.bf16.gmra.mrb[0].mxu0 %v928
        %v994 = vpop.f32.mrb[0].mxu0
        %v995 = vadd.f32 0.0, %v994
        %v996 = vpop.f32.mrb[0].mxu0
        %v997 = vpop.f32.mrb[0].mxu0
        %v998 = vadd.f32 0.0, %v997
        %v999 = vpop.f32.mrb[0].mxu0
        %1000 = vmatprep.mubr.bf16.mxu0 0
        %1001 = vmatmul.mubr.bf16.gmra.mrb[0].mxu0 %v931
        %v1002 = vpop.f32.mrb[0].mxu0
        %v1003 = vadd.f32 0.0, %v1002
        %v1004 = vpop.f32.mrb[0].mxu0
        %v1005 = vpop.f32.mrb[0].mxu0
        %v1006 = vpop.f32.mrb[0].mxu0
        %1007 = vdwg.mxu0
        %v1008 = vld [vmem:[#allocation3] sm:$0xff]
        %v1009 = vld [vmem:[#allocation3 + $0x8] sm:$0xff]
        %v1010 = vld [vmem:[#allocation3 + $0x10] sm:$0xff]
        %v1011 = vld [vmem:[#allocation3 + $0x18] sm:$0xff]
        %v1012 = vld [vmem:[#allocation3 + $0x20] sm:$0xff]
        %v1013 = vld [vmem:[#allocation3 + $0x28] sm:$0xff]
        %v1014 = vld [vmem:[#allocation3 + $0x30] sm:$0xff]
        %v1015 = vld [vmem:[#allocation3 + $0x38] sm:$0xff]
        %v1016 = vld [vmem:[#allocation3 + $0x40] sm:$0xff]
        %v1017 = vadd.f32 %v1008, %v971
        %v1018 = vadd.f32 %v1009, %v974
        %v1019 = vadd.f32 %v1010, %v979
        %v1020 = vadd.f32 %v1011, %v982
        %v1021 = vadd.f32 %v1012, %v987
        %v1022 = vadd.f32 %v1013, %v990
        %v1023 = vadd.f32 %v1014, %v995
        %v1024 = vadd.f32 %v1015, %v998
        %v1025 = vadd.f32 %v1016, %v1003
        %1026 = vst [vmem:[#allocation3] sm:$0xff] %v1017
        %1027 = vst [vmem:[#allocation3 + $0x8] sm:$0xff] %v1018
        %1028 = vst [vmem:[#allocation3 + $0x10] sm:$0xff] %v1019
        %1029 = vst [vmem:[#allocation3 + $0x18] sm:$0xff] %v1020
        %1030 = vst [vmem:[#allocation3 + $0x20] sm:$0xff] %v1021
        %1031 = vst [vmem:[#allocation3 + $0x28] sm:$0xff] %v1022
        %1032 = vst [vmem:[#allocation3 + $0x30] sm:$0xff] %v1023
        %1033 = vst [vmem:[#allocation3 + $0x38] sm:$0xff] %v1024
        %1034 = vst [vmem:[#allocation3 + $0x40] sm:$0xff] %v1025
        %s1035 = scalar_lea.vmem [#allocation2], 264
        %v1036 = vld [vmem:[%s1035] sm:$0xff]
        %v1037 = vld [vmem:[%s1035 + $0x8] sm:$0xff]
        %v1038 = vld [vmem:[%s1035 + $0x10] sm:$0xff]
        %v1039 = vld [vmem:[%s1035 + $0x18] sm:$0xff]
        %v1040 = vld [vmem:[%s1035 + $0x20] sm:$0xff]
        %v1041 = vld [vmem:[%s1035 + $0x28] sm:$0xff]
        %v1042 = vld [vmem:[%s1035 + $0x30] sm:$0xff]
        %v1043 = vld [vmem:[%s1035 + $0x38] sm:$0xff]
        %v1044 = vld [vmem:[%s1035 + $0x40] sm:$0xff]
        %v1045 = vpack.c.bf16 %v1037, %v1036
        %v1046 = vpack.c.bf16 %v1039, %v1038
        %v1047 = vpack.c.bf16 %v1041, %v1040
        %v1048 = vpack.c.bf16 %v1043, %v1042
        %v1049 = vpack.c.bf16 %v1044, %v1044
        %s1050 = scalar_lea.vmem [#allocation9], 8
        %v1051 = vld [vmem:[%s1050] sm:$0x3]
        %v1053 = vsel %vm458, %v1045, 0
        %v1056 = vsel %vm458, %v1046, 0
        %v1059 = vsel %vm458, %v1047, 0
        %v1062 = vsel %vm458, %v1048, 0
        %v1065 = vsel %vm458, %v1049, 0
        %v1068 = vsel %vm549, %v1051, 0
        %1070 = vmatprep.subr.bf16.mxu0 0
        %1071 = vmatpush1.bf16.msra.mxu0 %v1068
        %1072 = vmatprep.subr.bf16.mxu0 0
        %1073 = vmatpush1.bf16.msra.mxu0 0
        %1074 = vmatprep.subr.bf16.mxu0 0
        %1075 = vmatpush1.bf16.msra.mxu0 0
        %1076 = vmatprep.subr.bf16.mxu0 0
        %1077 = vmatpush1.bf16.msra.mxu0 0
        %1078 = vmatprep.subr.bf16.mxu0 0
        %1079 = vmatpush1.bf16.msra.mxu0 0
        %1080 = vmatprep.subr.bf16.mxu0 0
        %1081 = vmatpush1.bf16.msra.mxu0 0
        %1082 = vmatprep.subr.bf16.mxu0 0
        %1083 = vmatpush1.bf16.msra.mxu0 0
        %1084 = vmatprep.subr.bf16.mxu0 0
        %1085 = vmatpush1.bf16.msra.mxu0 0
        %1086 = vmatprep.subr.bf16.mxu0 0
        %1087 = vmatpush1.bf16.msra.mxu0 0
        %1088 = vmatprep.subr.bf16.mxu0 0
        %1089 = vmatpush1.bf16.msra.mxu0 0
        %1090 = vmatprep.subr.bf16.mxu0 0
        %1091 = vmatpush1.bf16.msra.mxu0 0
        %1092 = vmatprep.subr.bf16.mxu0 0
        %1093 = vmatpush1.bf16.msra.mxu0 0
        %1094 = vmatprep.subr.bf16.mxu0 0
        %1095 = vmatpush1.bf16.msra.mxu0 0
        %1096 = vmatprep.subr.bf16.mxu0 0
        %1097 = vmatpush1.bf16.msra.mxu0 0
        %1098 = vmatprep.subr.bf16.mxu0 0
        %1099 = vmatpush1.bf16.msra.mxu0 0
        %1100 = vmatprep.subr.bf16.mxu0 0
        %1101 = vmatpush1.bf16.msra.mxu0 0
        %1102 = vmatprep.mubr.bf16.mxu0 0
        %1103 = vmatmul.mubr.bf16.gmra.mrb[0].mxu0 %v1053
        %v1104 = vpop.f32.mrb[0].mxu0
        %v1105 = vadd.f32 0.0, %v1104
        %v1106 = vpop.f32.mrb[0].mxu0
        %v1107 = vpop.f32.mrb[0].mxu0
        %v1108 = vadd.f32 0.0, %v1107
        %v1109 = vpop.f32.mrb[0].mxu0
        %1110 = vmatprep.mubr.bf16.mxu0 0
        %1111 = vmatmul.mubr.bf16.gmra.mrb[0].mxu0 %v1056
        %v1112 = vpop.f32.mrb[0].mxu0
        %v1113 = vadd.f32 0.0, %v1112
        %v1114 = vpop.f32.mrb[0].mxu0
        %v1115 = vpop.f32.mrb[0].mxu0
        %v1116 = vadd.f32 0.0, %v1115
        %v1117 = vpop.f32.mrb[0].mxu0
        %1118 = vmatprep.mubr.bf16.mxu0 0
        %1119 = vmatmul.mubr.bf16.gmra.mrb[0].mxu0 %v1059
        %v1120 = vpop.f32.mrb[0].mxu0
        %v1121 = vadd.f32 0.0, %v1120
        %v1122 = vpop.f32.mrb[0].mxu0
        %v1123 = vpop.f32.mrb[0].mxu0
        %v1124 = vadd.f32 0.0, %v1123
        %v1125 = vpop.f32.mrb[0].mxu0
        %1126 = vmatprep.mubr.bf16.mxu0 0
        %1127 = vmatmul.mubr.bf16.gmra.mrb[0].mxu0 %v1062
        %v1128 = vpop.f32.mrb[0].mxu0
        %v1129 = vadd.f32 0.0, %v1128
        %v1130 = vpop.f32.mrb[0].mxu0
        %v1131 = vpop.f32.mrb[0].mxu0
        %v1132 = vadd.f32 0.0, %v1131
        %v1133 = vpop.f32.mrb[0].mxu0
        %1134 = vmatprep.mubr.bf16.mxu0 0
        %1135 = vmatmul.mubr.bf16.gmra.mrb[0].mxu0 %v1065
        %v1136 = vpop.f32.mrb[0].mxu0
        %v1137 = vadd.f32 0.0, %v1136
        %v1138 = vpop.f32.mrb[0].mxu0
        %v1139 = vpop.f32.mrb[0].mxu0
        %v1140 = vpop.f32.mrb[0].mxu0
        %1141 = vdwg.mxu0
        %v1142 = vld [vmem:[#allocation3] sm:$0xff]
        %v1143 = vld [vmem:[#allocation3 + $0x8] sm:$0xff]
        %v1144 = vld [vmem:[#allocation3 + $0x10] sm:$0xff]
        %v1145 = vld [vmem:[#allocation3 + $0x18] sm:$0xff]
        %v1146 = vld [vmem:[#allocation3 + $0x20] sm:$0xff]
        %v1147 = vld [vmem:[#allocation3 + $0x28] sm:$0xff]
        %v1148 = vld [vmem:[#allocation3 + $0x30] sm:$0xff]
        %v1149 = vld [vmem:[#allocation3 + $0x38] sm:$0xff]
        %v1150 = vld [vmem:[#allocation3 + $0x40] sm:$0xff]
        %v1151 = vadd.f32 %v1142, %v1105
        %v1152 = vadd.f32 %v1143, %v1108
        %v1153 = vadd.f32 %v1144, %v1113
        %v1154 = vadd.f32 %v1145, %v1116
        %v1155 = vadd.f32 %v1146, %v1121
        %v1156 = vadd.f32 %v1147, %v1124
        %v1157 = vadd.f32 %v1148, %v1129
        %v1158 = vadd.f32 %v1149, %v1132
        %v1159 = vadd.f32 %v1150, %v1137
        %1160 = vst [vmem:[#allocation3] sm:$0xff] %v1151
        %1161 = vst [vmem:[#allocation3 + $0x8] sm:$0xff] %v1152
        %1162 = vst [vmem:[#allocation3 + $0x10] sm:$0xff] %v1153
        %1163 = vst [vmem:[#allocation3 + $0x18] sm:$0xff] %v1154
        %1164 = vst [vmem:[#allocation3 + $0x20] sm:$0xff] %v1155
        %1165 = vst [vmem:[#allocation3 + $0x28] sm:$0xff] %v1156
        %1166 = vst [vmem:[#allocation3 + $0x30] sm:$0xff] %v1157
        %1167 = vst [vmem:[#allocation3 + $0x38] sm:$0xff] %v1158
        %1168 = vst [vmem:[#allocation3 + $0x40] sm:$0xff] %v1159
        %v1169 = vld [vmem:[%s901 + $0x1] sm:$0xff]
        %v1170 = vld [vmem:[%s901 + $0x9] sm:$0xff]
        %v1171 = vld [vmem:[%s901 + $0x11] sm:$0xff]
        %v1172 = vld [vmem:[%s901 + $0x19] sm:$0xff]
        %v1173 = vld [vmem:[%s901 + $0x21] sm:$0xff]
        %v1174 = vld [vmem:[%s901 + $0x29] sm:$0xff]
        %v1175 = vld [vmem:[%s901 + $0x31] sm:$0xff]
        %v1176 = vld [vmem:[%s901 + $0x39] sm:$0xff]
        %v1177 = vld [vmem:[%s901 + $0x41] sm:$0xff]
        %v1178 = vpack.c.bf16 %v1170, %v1169
        %v1179 = vpack.c.bf16 %v1172, %v1171
        %v1180 = vpack.c.bf16 %v1174, %v1173
        %v1181 = vpack.c.bf16 %v1176, %v1175
        %v1182 = vpack.c.bf16 %v1177, %v1177
        %s1183 = scalar_lea.vmem [#allocation9], 10
        %v1184 = vld [vmem:[%s1183] sm:$0x3]
        %v1186 = vsel %vm458, %v1178, 0
        %v1189 = vsel %vm458, %v1179, 0
        %v1192 = vsel %vm458, %v1180, 0
        %v1195 = vsel %vm458, %v1181, 0
        %v1198 = vsel %vm458, %v1182, 0
        %v1201 = vsel %vm549, %v1184, 0
        %1203 = vmatprep.subr.bf16.mxu0 0
        %1204 = vmatpush1.bf16.msra.mxu0 %v1201
        %1205 = vmatprep.subr.bf16.mxu0 0
        %1206 = vmatpush1.bf16.msra.mxu0 0
        %1207 = vmatprep.subr.bf16.mxu0 0
        %1208 = vmatpush1.bf16.msra.mxu0 0
        %1209 = vmatprep.subr.bf16.mxu0 0
        %1210 = vmatpush1.bf16.msra.mxu0 0
        %1211 = vmatprep.subr.bf16.mxu0 0
        %1212 = vmatpush1.bf16.msra.mxu0 0
        %1213 = vmatprep.subr.bf16.mxu0 0
        %1214 = vmatpush1.bf16.msra.mxu0 0
        %1215 = vmatprep.subr.bf16.mxu0 0
        %1216 = vmatpush1.bf16.msra.mxu0 0
        %1217 = vmatprep.subr.bf16.mxu0 0
        %1218 = vmatpush1.bf16.msra.mxu0 0
        %1219 = vmatprep.subr.bf16.mxu0 0
        %1220 = vmatpush1.bf16.msra.mxu0 0
        %1221 = vmatprep.subr.bf16.mxu0 0
        %1222 = vmatpush1.bf16.msra.mxu0 0
        %1223 = vmatprep.subr.bf16.mxu0 0
        %1224 = vmatpush1.bf16.msra.mxu0 0
        %1225 = vmatprep.subr.bf16.mxu0 0
        %1226 = vmatpush1.bf16.msra.mxu0 0
        %1227 = vmatprep.subr.bf16.mxu0 0
        %1228 = vmatpush1.bf16.msra.mxu0 0
        %1229 = vmatprep.subr.bf16.mxu0 0
        %1230 = vmatpush1.bf16.msra.mxu0 0
        %1231 = vmatprep.subr.bf16.mxu0 0
        %1232 = vmatpush1.bf16.msra.mxu0 0
        %1233 = vmatprep.subr.bf16.mxu0 0
        %1234 = vmatpush1.bf16.msra.mxu0 0
        %1235 = vmatprep.mubr.bf16.mxu0 0
        %1236 = vmatmul.mubr.bf16.gmra.mrb[0].mxu0 %v1186
        %v1237 = vpop.f32.mrb[0].mxu0
        %v1238 = vadd.f32 0.0, %v1237
        %v1239 = vpop.f32.mrb[0].mxu0
        %v1240 = vpop.f32.mrb[0].mxu0
        %v1241 = vadd.f32 0.0, %v1240
        %v1242 = vpop.f32.mrb[0].mxu0
        %1243 = vmatprep.mubr.bf16.mxu0 0
        %1244 = vmatmul.mubr.bf16.gmra.mrb[0].mxu0 %v1189
        %v1245 = vpop.f32.mrb[0].mxu0
        %v1246 = vadd.f32 0.0, %v1245
        %v1247 = vpop.f32.mrb[0].mxu0
        %v1248 = vpop.f32.mrb[0].mxu0
        %v1249 = vadd.f32 0.0, %v1248
        %v1250 = vpop.f32.mrb[0].mxu0
        %1251 = vmatprep.mubr.bf16.mxu0 0
        %1252 = vmatmul.mubr.bf16.gmra.mrb[0].mxu0 %v1192
        %v1253 = vpop.f32.mrb[0].mxu0
        %v1254 = vadd.f32 0.0, %v1253
        %v1255 = vpop.f32.mrb[0].mxu0
        %v1256 = vpop.f32.mrb[0].mxu0
        %v1257 = vadd.f32 0.0, %v1256
        %v1258 = vpop.f32.mrb[0].mxu0
        %1259 = vmatprep.mubr.bf16.mxu0 0
        %1260 = vmatmul.mubr.bf16.gmra.mrb[0].mxu0 %v1195
        %v1261 = vpop.f32.mrb[0].mxu0
        %v1262 = vadd.f32 0.0, %v1261
        %v1263 = vpop.f32.mrb[0].mxu0
        %v1264 = vpop.f32.mrb[0].mxu0
        %v1265 = vadd.f32 0.0, %v1264
        %v1266 = vpop.f32.mrb[0].mxu0
        %1267 = vmatprep.mubr.bf16.mxu0 0
        %1268 = vmatmul.mubr.bf16.gmra.mrb[0].mxu0 %v1198
        %v1269 = vpop.f32.mrb[0].mxu0
        %v1270 = vadd.f32 0.0, %v1269
        %v1271 = vpop.f32.mrb[0].mxu0
        %v1272 = vpop.f32.mrb[0].mxu0
        %v1273 = vpop.f32.mrb[0].mxu0
        %1274 = vdwg.mxu0
        %v1275 = vld [vmem:[#allocation3] sm:$0xff]
        %v1276 = vld [vmem:[#allocation3 + $0x8] sm:$0xff]
        %v1277 = vld [vmem:[#allocation3 + $0x10] sm:$0xff]
        %v1278 = vld [vmem:[#allocation3 + $0x18] sm:$0xff]
        %v1279 = vld [vmem:[#allocation3 + $0x20] sm:$0xff]
        %v1280 = vld [vmem:[#allocation3 + $0x28] sm:$0xff]
        %v1281 = vld [vmem:[#allocation3 + $0x30] sm:$0xff]
        %v1282 = vld [vmem:[#allocation3 + $0x38] sm:$0xff]
        %v1283 = vld [vmem:[#allocation3 + $0x40] sm:$0xff]
        %v1284 = vadd.f32 %v1275, %v1238
        %v1285 = vadd.f32 %v1276, %v1241
        %v1286 = vadd.f32 %v1277, %v1246
        %v1287 = vadd.f32 %v1278, %v1249
        %v1288 = vadd.f32 %v1279, %v1254
        %v1289 = vadd.f32 %v1280, %v1257
        %v1290 = vadd.f32 %v1281, %v1262
        %v1291 = vadd.f32 %v1282, %v1265
        %v1292 = vadd.f32 %v1283, %v1270
        %1293 = vst [vmem:[#allocation3] sm:$0xff] %v1284
        %1294 = vst [vmem:[#allocation3 + $0x8] sm:$0xff] %v1285
        %1295 = vst [vmem:[#allocation3 + $0x10] sm:$0xff] %v1286
        %1296 = vst [vmem:[#allocation3 + $0x18] sm:$0xff] %v1287
        %1297 = vst [vmem:[#allocation3 + $0x20] sm:$0xff] %v1288
        %1298 = vst [vmem:[#allocation3 + $0x28] sm:$0xff] %v1289
        %1299 = vst [vmem:[#allocation3 + $0x30] sm:$0xff] %v1290
        %1300 = vst [vmem:[#allocation3 + $0x38] sm:$0xff] %v1291
        %1301 = vst [vmem:[#allocation3 + $0x40] sm:$0xff] %v1292
        %v1302 = vld [vmem:[#allocation2 + $0x9] sm:$0xff]
        %v1303 = vld [vmem:[#allocation2 + $0x11] sm:$0xff]
        %v1304 = vld [vmem:[#allocation2 + $0x19] sm:$0xff]
        %v1305 = vld [vmem:[#allocation2 + $0x21] sm:$0xff]
        %v1306 = vld [vmem:[#allocation2 + $0x29] sm:$0xff]
        %v1307 = vld [vmem:[#allocation2 + $0x31] sm:$0xff]
        %v1308 = vld [vmem:[#allocation2 + $0x39] sm:$0xff]
        %v1309 = vld [vmem:[#allocation2 + $0x41] sm:$0xff]
        %v1310 = vld [vmem:[#allocation2 + $0x49] sm:$0xff]
        %v1311 = vpack.c.bf16 %v1303, %v1302
        %v1312 = vpack.c.bf16 %v1305, %v1304
        %v1313 = vpack.c.bf16 %v1307, %v1306
        %v1314 = vpack.c.bf16 %v1309, %v1308
        %v1315 = vpack.c.bf16 %v1310, %v1310
        %s1316 = scalar_lea.vmem [#allocation9], 12
        %v1317 = vld [vmem:[%s1316] sm:$0x3]
        %v1319 = vsel %vm458, %v1311, 0
        %v1322 = vsel %vm458, %v1312, 0
        %v1325 = vsel %vm458, %v1313, 0
        %v1328 = vsel %vm458, %v1314, 0
        %v1331 = vsel %vm458, %v1315, 0
        %v1334 = vsel %vm549, %v1317, 0
        %1336 = vmatprep.subr.bf16.mxu0 0
        %1337 = vmatpush1.bf16.msra.mxu0 %v1334
        %1338 = vmatprep.subr.bf16.mxu0 0
        %1339 = vmatpush1.bf16.msra.mxu0 0
        %1340 = vmatprep.subr.bf16.mxu0 0
        %1341 = vmatpush1.bf16.msra.mxu0 0
        %1342 = vmatprep.subr.bf16.mxu0 0
        %1343 = vmatpush1.bf16.msra.mxu0 0
        %1344 = vmatprep.subr.bf16.mxu0 0
        %1345 = vmatpush1.bf16.msra.mxu0 0
        %1346 = vmatprep.subr.bf16.mxu0 0
        %1347 = vmatpush1.bf16.msra.mxu0 0
        %1348 = vmatprep.subr.bf16.mxu0 0
        %1349 = vmatpush1.bf16.msra.mxu0 0
        %1350 = vmatprep.subr.bf16.mxu0 0
        %1351 = vmatpush1.bf16.msra.mxu0 0
        %1352 = vmatprep.subr.bf16.mxu0 0
        %1353 = vmatpush1.bf16.msra.mxu0 0
        %1354 = vmatprep.subr.bf16.mxu0 0
        %1355 = vmatpush1.bf16.msra.mxu0 0
        %1356 = vmatprep.subr.bf16.mxu0 0
        %1357 = vmatpush1.bf16.msra.mxu0 0
        %1358 = vmatprep.subr.bf16.mxu0 0
        %1359 = vmatpush1.bf16.msra.mxu0 0
        %1360 = vmatprep.subr.bf16.mxu0 0
        %1361 = vmatpush1.bf16.msra.mxu0 0
        %1362 = vmatprep.subr.bf16.mxu0 0
        %1363 = vmatpush1.bf16.msra.mxu0 0
        %1364 = vmatprep.subr.bf16.mxu0 0
        %1365 = vmatpush1.bf16.msra.mxu0 0
        %1366 = vmatprep.subr.bf16.mxu0 0
        %1367 = vmatpush1.bf16.msra.mxu0 0
        %1368 = vmatprep.mubr.bf16.mxu0 0
        %1369 = vmatmul.mubr.bf16.gmra.mrb[0].mxu0 %v1319
        %v1370 = vpop.f32.mrb[0].mxu0
        %v1371 = vadd.f32 0.0, %v1370
        %v1372 = vpop.f32.mrb[0].mxu0
        %v1373 = vpop.f32.mrb[0].mxu0
        %v1374 = vadd.f32 0.0, %v1373
        %v1375 = vpop.f32.mrb[0].mxu0
        %1376 = vmatprep.mubr.bf16.mxu0 0
        %1377 = vmatmul.mubr.bf16.gmra.mrb[0].mxu0 %v1322
        %v1378 = vpop.f32.mrb[0].mxu0
        %v1379 = vadd.f32 0.0, %v1378
        %v1380 = vpop.f32.mrb[0].mxu0
        %v1381 = vpop.f32.mrb[0].mxu0
        %v1382 = vadd.f32 0.0, %v1381
        %v1383 = vpop.f32.mrb[0].mxu0
        %1384 = vmatprep.mubr.bf16.mxu0 0
        %1385 = vmatmul.mubr.bf16.gmra.mrb[0].mxu0 %v1325
        %v1386 = vpop.f32.mrb[0].mxu0
        %v1387 = vadd.f32 0.0, %v1386
        %v1388 = vpop.f32.mrb[0].mxu0
        %v1389 = vpop.f32.mrb[0].mxu0
        %v1390 = vadd.f32 0.0, %v1389
        %v1391 = vpop.f32.mrb[0].mxu0
        %1392 = vmatprep.mubr.bf16.mxu0 0
        %1393 = vmatmul.mubr.bf16.gmra.mrb[0].mxu0 %v1328
        %v1394 = vpop.f32.mrb[0].mxu0
        %v1395 = vadd.f32 0.0, %v1394
        %v1396 = vpop.f32.mrb[0].mxu0
        %v1397 = vpop.f32.mrb[0].mxu0
        %v1398 = vadd.f32 0.0, %v1397
        %v1399 = vpop.f32.mrb[0].mxu0
        %1400 = vmatprep.mubr.bf16.mxu0 0
        %1401 = vmatmul.mubr.bf16.gmra.mrb[0].mxu0 %v1331
        %v1402 = vpop.f32.mrb[0].mxu0
        %v1403 = vadd.f32 0.0, %v1402
        %v1404 = vpop.f32.mrb[0].mxu0
        %v1405 = vpop.f32.mrb[0].mxu0
        %v1406 = vpop.f32.mrb[0].mxu0
        %1407 = vdwg.mxu0
        %v1408 = vld [vmem:[#allocation3] sm:$0xff]
        %v1409 = vld [vmem:[#allocation3 + $0x8] sm:$0xff]
        %v1410 = vld [vmem:[#allocation3 + $0x10] sm:$0xff]
        %v1411 = vld [vmem:[#allocation3 + $0x18] sm:$0xff]
        %v1412 = vld [vmem:[#allocation3 + $0x20] sm:$0xff]
        %v1413 = vld [vmem:[#allocation3 + $0x28] sm:$0xff]
        %v1414 = vld [vmem:[#allocation3 + $0x30] sm:$0xff]
        %v1415 = vld [vmem:[#allocation3 + $0x38] sm:$0xff]
        %v1416 = vld [vmem:[#allocation3 + $0x40] sm:$0xff]
        %v1417 = vadd.f32 %v1408, %v1371
        %v1418 = vadd.f32 %v1409, %v1374
        %v1419 = vadd.f32 %v1410, %v1379
        %v1420 = vadd.f32 %v1411, %v1382
        %v1421 = vadd.f32 %v1412, %v1387
        %v1422 = vadd.f32 %v1413, %v1390
        %v1423 = vadd.f32 %v1414, %v1395
        %v1424 = vadd.f32 %v1415, %v1398
        %v1425 = vadd.f32 %v1416, %v1403
        %1426 = vst [vmem:[#allocation3] sm:$0xff] %v1417
        %1427 = vst [vmem:[#allocation3 + $0x8] sm:$0xff] %v1418
        %1428 = vst [vmem:[#allocation3 + $0x10] sm:$0xff] %v1419
        %1429 = vst [vmem:[#allocation3 + $0x18] sm:$0xff] %v1420
        %1430 = vst [vmem:[#allocation3 + $0x20] sm:$0xff] %v1421
        %1431 = vst [vmem:[#allocation3 + $0x28] sm:$0xff] %v1422
        %1432 = vst [vmem:[#allocation3 + $0x30] sm:$0xff] %v1423
        %1433 = vst [vmem:[#allocation3 + $0x38] sm:$0xff] %v1424
        %1434 = vst [vmem:[#allocation3 + $0x40] sm:$0xff] %v1425
        %v1435 = vld [vmem:[%s634 + $0x9] sm:$0xff]
        %v1436 = vld [vmem:[%s634 + $0x11] sm:$0xff]
        %v1437 = vld [vmem:[%s634 + $0x19] sm:$0xff]
        %v1438 = vld [vmem:[%s634 + $0x21] sm:$0xff]
        %v1439 = vld [vmem:[%s634 + $0x29] sm:$0xff]
        %v1440 = vld [vmem:[%s634 + $0x31] sm:$0xff]
        %v1441 = vld [vmem:[%s634 + $0x39] sm:$0xff]
        %v1442 = vld [vmem:[%s634 + $0x41] sm:$0xff]
        %v1443 = vld [vmem:[%s634 + $0x49] sm:$0xff]
        %v1444 = vpack.c.bf16 %v1436, %v1435
        %v1445 = vpack.c.bf16 %v1438, %v1437
        %v1446 = vpack.c.bf16 %v1440, %v1439
        %v1447 = vpack.c.bf16 %v1442, %v1441
        %v1448 = vpack.c.bf16 %v1443, %v1443
        %s1449 = scalar_lea.vmem [#allocation9], 14
        %v1450 = vld [vmem:[%s1449] sm:$0x3]
        %v1452 = vsel %vm458, %v1444, 0
        %v1455 = vsel %vm458, %v1445, 0
        %v1458 = vsel %vm458, %v1446, 0
        %v1461 = vsel %vm458, %v1447, 0
        %v1464 = vsel %vm458, %v1448, 0
        %v1467 = vsel %vm549, %v1450, 0
        %1469 = vmatprep.subr.bf16.mxu0 0
        %1470 = vmatpush1.bf16.msra.mxu0 %v1467
        %1471 = vmatprep.subr.bf16.mxu0 0
        %1472 = vmatpush1.bf16.msra.mxu0 0
        %1473 = vmatprep.subr.bf16.mxu0 0
        %1474 = vmatpush1.bf16.msra.mxu0 0
        %1475 = vmatprep.subr.bf16.mxu0 0
        %1476 = vmatpush1.bf16.msra.mxu0 0
        %1477 = vmatprep.subr.bf16.mxu0 0
        %1478 = vmatpush1.bf16.msra.mxu0 0
        %1479 = vmatprep.subr.bf16.mxu0 0
        %1480 = vmatpush1.bf16.msra.mxu0 0
        %1481 = vmatprep.subr.bf16.mxu0 0
        %1482 = vmatpush1.bf16.msra.mxu0 0
        %1483 = vmatprep.subr.bf16.mxu0 0
        %1484 = vmatpush1.bf16.msra.mxu0 0
        %1485 = vmatprep.subr.bf16.mxu0 0
        %1486 = vmatpush1.bf16.msra.mxu0 0
        %1487 = vmatprep.subr.bf16.mxu0 0
        %1488 = vmatpush1.bf16.msra.mxu0 0
        %1489 = vmatprep.subr.bf16.mxu0 0
        %1490 = vmatpush1.bf16.msra.mxu0 0
        %1491 = vmatprep.subr.bf16.mxu0 0
        %1492 = vmatpush1.bf16.msra.mxu0 0
        %1493 = vmatprep.subr.bf16.mxu0 0
        %1494 = vmatpush1.bf16.msra.mxu0 0
        %1495 = vmatprep.subr.bf16.mxu0 0
        %1496 = vmatpush1.bf16.msra.mxu0 0
        %1497 = vmatprep.subr.bf16.mxu0 0
        %1498 = vmatpush1.bf16.msra.mxu0 0
        %1499 = vmatprep.subr.bf16.mxu0 0
        %1500 = vmatpush1.bf16.msra.mxu0 0
        %1501 = vmatprep.mubr.bf16.mxu0 0
        %1502 = vmatmul.mubr.bf16.gmra.mrb[0].mxu0 %v1452
        %v1503 = vpop.f32.mrb[0].mxu0
        %v1504 = vadd.f32 0.0, %v1503
        %v1505 = vpop.f32.mrb[0].mxu0
        %v1506 = vpop.f32.mrb[0].mxu0
        %v1507 = vadd.f32 0.0, %v1506
        %v1508 = vpop.f32.mrb[0].mxu0
        %1509 = vmatprep.mubr.bf16.mxu0 0
        %1510 = vmatmul.mubr.bf16.gmra.mrb[0].mxu0 %v1455
        %v1511 = vpop.f32.mrb[0].mxu0
        %v1512 = vadd.f32 0.0, %v1511
        %v1513 = vpop.f32.mrb[0].mxu0
        %v1514 = vpop.f32.mrb[0].mxu0
        %v1515 = vadd.f32 0.0, %v1514
        %v1516 = vpop.f32.mrb[0].mxu0
        %1517 = vmatprep.mubr.bf16.mxu0 0
        %1518 = vmatmul.mubr.bf16.gmra.mrb[0].mxu0 %v1458
        %v1519 = vpop.f32.mrb[0].mxu0
        %v1520 = vadd.f32 0.0, %v1519
        %v1521 = vpop.f32.mrb[0].mxu0
        %v1522 = vpop.f32.mrb[0].mxu0
        %v1523 = vadd.f32 0.0, %v1522
        %v1524 = vpop.f32.mrb[0].mxu0
        %1525 = vmatprep.mubr.bf16.mxu0 0
        %1526 = vmatmul.mubr.bf16.gmra.mrb[0].mxu0 %v1461
        %v1527 = vpop.f32.mrb[0].mxu0
        %v1528 = vadd.f32 0.0, %v1527
        %v1529 = vpop.f32.mrb[0].mxu0
        %v1530 = vpop.f32.mrb[0].mxu0
        %v1531 = vadd.f32 0.0, %v1530
        %v1532 = vpop.f32.mrb[0].mxu0
        %1533 = vmatprep.mubr.bf16.mxu0 0
        %1534 = vmatmul.mubr.bf16.gmra.mrb[0].mxu0 %v1464
        %v1535 = vpop.f32.mrb[0].mxu0
        %v1536 = vadd.f32 0.0, %v1535
        %v1537 = vpop.f32.mrb[0].mxu0
        %v1538 = vpop.f32.mrb[0].mxu0
        %v1539 = vpop.f32.mrb[0].mxu0
        %1540 = vdwg.mxu0
        %v1541 = vld [vmem:[#allocation3] sm:$0xff]
        %v1542 = vld [vmem:[#allocation3 + $0x8] sm:$0xff]
        %v1543 = vld [vmem:[#allocation3 + $0x10] sm:$0xff]
        %v1544 = vld [vmem:[#allocation3 + $0x18] sm:$0xff]
        %v1545 = vld [vmem:[#allocation3 + $0x20] sm:$0xff]
        %v1546 = vld [vmem:[#allocation3 + $0x28] sm:$0xff]
        %v1547 = vld [vmem:[#allocation3 + $0x30] sm:$0xff]
        %v1548 = vld [vmem:[#allocation3 + $0x38] sm:$0xff]
        %v1549 = vld [vmem:[#allocation3 + $0x40] sm:$0xff]
        %v1550 = vadd.f32 %v1541, %v1504
        %v1551 = vadd.f32 %v1542, %v1507
        %v1552 = vadd.f32 %v1543, %v1512
        %v1553 = vadd.f32 %v1544, %v1515
        %v1554 = vadd.f32 %v1545, %v1520
        %v1555 = vadd.f32 %v1546, %v1523
        %v1556 = vadd.f32 %v1547, %v1528
        %v1557 = vadd.f32 %v1548, %v1531
        %v1558 = vadd.f32 %v1549, %v1536
        %1559 = vst [vmem:[#allocation3] sm:$0xff] %v1550
        %1560 = vst [vmem:[#allocation3 + $0x8] sm:$0xff] %v1551
        %1561 = vst [vmem:[#allocation3 + $0x10] sm:$0xff] %v1552
        %1562 = vst [vmem:[#allocation3 + $0x18] sm:$0xff] %v1553
        %1563 = vst [vmem:[#allocation3 + $0x20] sm:$0xff] %v1554
        %1564 = vst [vmem:[#allocation3 + $0x28] sm:$0xff] %v1555
        %1565 = vst [vmem:[#allocation3 + $0x30] sm:$0xff] %v1556
        %1566 = vst [vmem:[#allocation3 + $0x38] sm:$0xff] %v1557
        %1567 = vst [vmem:[#allocation3 + $0x40] sm:$0xff] %v1558
        %v1568 = vld [vmem:[#allocation2 + $0xa] sm:$0xff]
        %v1569 = vld [vmem:[#allocation2 + $0x12] sm:$0xff]
        %v1570 = vld [vmem:[#allocation2 + $0x1a] sm:$0xff]
        %v1571 = vld [vmem:[#allocation2 + $0x22] sm:$0xff]
        %v1572 = vld [vmem:[#allocation2 + $0x2a] sm:$0xff]
        %v1573 = vld [vmem:[#allocation2 + $0x32] sm:$0xff]
        %v1574 = vld [vmem:[#allocation2 + $0x3a] sm:$0xff]
        %v1575 = vld [vmem:[#allocation2 + $0x42] sm:$0xff]
        %v1576 = vld [vmem:[#allocation2 + $0x4a] sm:$0xff]
        %v1577 = vpack.c.bf16 %v1569, %v1568
        %v1578 = vpack.c.bf16 %v1571, %v1570
        %v1579 = vpack.c.bf16 %v1573, %v1572
        %v1580 = vpack.c.bf16 %v1575, %v1574
        %v1581 = vpack.c.bf16 %v1576, %v1576
        %s1582 = scalar_lea.vmem [#allocation9], 16
        %v1583 = vld [vmem:[%s1582] sm:$0x3]
        %v1585 = vsel %vm458, %v1577, 0
        %v1588 = vsel %vm458, %v1578, 0
        %v1591 = vsel %vm458, %v1579, 0
        %v1594 = vsel %vm458, %v1580, 0
        %v1597 = vsel %vm458, %v1581, 0
        %v1600 = vsel %vm549, %v1583, 0
        %1602 = vmatprep.subr.bf16.mxu0 0
        %1603 = vmatpush1.bf16.msra.mxu0 %v1600
        %1604 = vmatprep.subr.bf16.mxu0 0
        %1605 = vmatpush1.bf16.msra.mxu0 0
        %1606 = vmatprep.subr.bf16.mxu0 0
        %1607 = vmatpush1.bf16.msra.mxu0 0
        %1608 = vmatprep.subr.bf16.mxu0 0
        %1609 = vmatpush1.bf16.msra.mxu0 0
        %1610 = vmatprep.subr.bf16.mxu0 0
        %1611 = vmatpush1.bf16.msra.mxu0 0
        %1612 = vmatprep.subr.bf16.mxu0 0
        %1613 = vmatpush1.bf16.msra.mxu0 0
        %1614 = vmatprep.subr.bf16.mxu0 0
        %1615 = vmatpush1.bf16.msra.mxu0 0
        %1616 = vmatprep.subr.bf16.mxu0 0
        %1617 = vmatpush1.bf16.msra.mxu0 0
        %1618 = vmatprep.subr.bf16.mxu0 0
        %1619 = vmatpush1.bf16.msra.mxu0 0
        %1620 = vmatprep.subr.bf16.mxu0 0
        %1621 = vmatpush1.bf16.msra.mxu0 0
        %1622 = vmatprep.subr.bf16.mxu0 0
        %1623 = vmatpush1.bf16.msra.mxu0 0
        %1624 = vmatprep.subr.bf16.mxu0 0
        %1625 = vmatpush1.bf16.msra.mxu0 0
        %1626 = vmatprep.subr.bf16.mxu0 0
        %1627 = vmatpush1.bf16.msra.mxu0 0
        %1628 = vmatprep.subr.bf16.mxu0 0
        %1629 = vmatpush1.bf16.msra.mxu0 0
        %1630 = vmatprep.subr.bf16.mxu0 0
        %1631 = vmatpush1.bf16.msra.mxu0 0
        %1632 = vmatprep.subr.bf16.mxu0 0
        %1633 = vmatpush1.bf16.msra.mxu0 0
        %1634 = vmatprep.mubr.bf16.mxu0 0
        %1635 = vmatmul.mubr.bf16.gmra.mrb[0].mxu0 %v1585
        %v1636 = vpop.f32.mrb[0].mxu0
        %v1637 = vadd.f32 0.0, %v1636
        %v1638 = vpop.f32.mrb[0].mxu0
        %v1639 = vpop.f32.mrb[0].mxu0
        %v1640 = vadd.f32 0.0, %v1639
        %v1641 = vpop.f32.mrb[0].mxu0
        %1642 = vmatprep.mubr.bf16.mxu0 0
        %1643 = vmatmul.mubr.bf16.gmra.mrb[0].mxu0 %v1588
        %v1644 = vpop.f32.mrb[0].mxu0
        %v1645 = vadd.f32 0.0, %v1644
        %v1646 = vpop.f32.mrb[0].mxu0
        %v1647 = vpop.f32.mrb[0].mxu0
        %v1648 = vadd.f32 0.0, %v1647
        %v1649 = vpop.f32.mrb[0].mxu0
        %1650 = vmatprep.mubr.bf16.mxu0 0
        %1651 = vmatmul.mubr.bf16.gmra.mrb[0].mxu0 %v1591
        %v1652 = vpop.f32.mrb[0].mxu0
        %v1653 = vadd.f32 0.0, %v1652
        %v1654 = vpop.f32.mrb[0].mxu0
        %v1655 = vpop.f32.mrb[0].mxu0
        %v1656 = vadd.f32 0.0, %v1655
        %v1657 = vpop.f32.mrb[0].mxu0
        %1658 = vmatprep.mubr.bf16.mxu0 0
        %1659 = vmatmul.mubr.bf16.gmra.mrb[0].mxu0 %v1594
        %v1660 = vpop.f32.mrb[0].mxu0
        %v1661 = vadd.f32 0.0, %v1660
        %v1662 = vpop.f32.mrb[0].mxu0
        %v1663 = vpop.f32.mrb[0].mxu0
        %v1664 = vadd.f32 0.0, %v1663
        %v1665 = vpop.f32.mrb[0].mxu0
        %1666 = vmatprep.mubr.bf16.mxu0 0
        %1667 = vmatmul.mubr.bf16.gmra.mrb[0].mxu0 %v1597
        %v1668 = vpop.f32.mrb[0].mxu0
        %v1669 = vadd.f32 0.0, %v1668
        %v1670 = vpop.f32.mrb[0].mxu0
        %v1671 = vpop.f32.mrb[0].mxu0
        %v1672 = vpop.f32.mrb[0].mxu0
        %1673 = vdwg.mxu0
        %v1674 = vld [vmem:[#allocation3] sm:$0xff]
        %v1675 = vld [vmem:[#allocation3 + $0x8] sm:$0xff]
        %v1676 = vld [vmem:[#allocation3 + $0x10] sm:$0xff]
        %v1677 = vld [vmem:[#allocation3 + $0x18] sm:$0xff]
        %v1678 = vld [vmem:[#allocation3 + $0x20] sm:$0xff]
        %v1679 = vld [vmem:[#allocation3 + $0x28] sm:$0xff]
        %v1680 = vld [vmem:[#allocation3 + $0x30] sm:$0xff]
        %v1681 = vld [vmem:[#allocation3 + $0x38] sm:$0xff]
        %v1682 = vld [vmem:[#allocation3 + $0x40] sm:$0xff]
        %v1683 = vadd.f32 %v1674, %v1637
        %v1684 = vadd.f32 %v1675, %v1640
        %v1685 = vadd.f32 %v1676, %v1645
        %v1686 = vadd.f32 %v1677, %v1648
        %v1687 = vadd.f32 %v1678, %v1653
        %v1688 = vadd.f32 %v1679, %v1656
        %v1689 = vadd.f32 %v1680, %v1661
        %v1690 = vadd.f32 %v1681, %v1664
        %v1691 = vadd.f32 %v1682, %v1669
        %1692 = vst [vmem:[#allocation3] sm:$0xff] %v1683
        %1693 = vst [vmem:[#allocation3 + $0x8] sm:$0xff] %v1684
        %1694 = vst [vmem:[#allocation3 + $0x10] sm:$0xff] %v1685
        %1695 = vst [vmem:[#allocation3 + $0x18] sm:$0xff] %v1686
        %1696 = vst [vmem:[#allocation3 + $0x20] sm:$0xff] %v1687
        %1697 = vst [vmem:[#allocation3 + $0x28] sm:$0xff] %v1688
        %1698 = vst [vmem:[#allocation3 + $0x30] sm:$0xff] %v1689
        %1699 = vst [vmem:[#allocation3 + $0x38] sm:$0xff] %v1690
        %1700 = vst [vmem:[#allocation3 + $0x40] sm:$0xff] %v1691
        %v1701 = vld [vmem:[#allocation3] sm:$0xff]
        %v1702 = vld [vmem:[#allocation3 + $0x8] sm:$0xff]
        %v1703 = vld [vmem:[#allocation3 + $0x10] sm:$0xff]
        %v1704 = vld [vmem:[#allocation3 + $0x18] sm:$0xff]
        %v1705 = vld [vmem:[#allocation3 + $0x20] sm:$0xff]
        %v1706 = vld [vmem:[#allocation3 + $0x28] sm:$0xff]
        %v1707 = vld [vmem:[#allocation3 + $0x30] sm:$0xff]
        %v1708 = vld [vmem:[#allocation3 + $0x38] sm:$0xff]
        %v1709 = vld [vmem:[#allocation3 + $0x40] sm:$0xff]
        %v1710 = vld [vmem:[#allocation10] sm:$0x1]
        %v1712 = vlaneseq
        %v1713 = vshrl.u32 %v1712, 7
        %v1714 = vsub.s32 0, %v1713
        %v1715 = vrot.slane %v1710, %v1714
        %v1717 = vadd.f32 %v1701, %v1715
        %v1718 = vadd.f32 %v1702, %v1715
        %v1719 = vadd.f32 %v1703, %v1715
        %v1720 = vadd.f32 %v1704, %v1715
        %v1721 = vadd.f32 %v1705, %v1715
        %v1722 = vadd.f32 %v1706, %v1715
        %v1723 = vadd.f32 %v1707, %v1715
        %v1724 = vadd.f32 %v1708, %v1715
        %v1725 = vadd.f32 %v1709, %v1715
        %vm1726 = vcmp.gt.f32.partialorder %v1717, 0.0
        %vm1727 = vcmp.gt.f32.partialorder %v1718, 0.0
        %vm1728 = vcmp.gt.f32.partialorder %v1719, 0.0
        %vm1729 = vcmp.gt.f32.partialorder %v1720, 0.0
        %vm1730 = vcmp.gt.f32.partialorder %v1721, 0.0
        %vm1731 = vcmp.gt.f32.partialorder %v1722, 0.0
        %vm1732 = vcmp.gt.f32.partialorder %v1723, 0.0
        %vm1733 = vcmp.gt.f32.partialorder %v1724, 0.0
        %vm1734 = vcmp.gt.f32.partialorder %v1725, 0.0
        %v1735 = vmul.f32 %v1717, 0.1
        %v1736 = vmul.f32 %v1718, 0.1
        %v1737 = vmul.f32 %v1719, 0.1
        %v1738 = vmul.f32 %v1720, 0.1
        %v1739 = vmul.f32 %v1721, 0.1
        %v1740 = vmul.f32 %v1722, 0.1
        %v1741 = vmul.f32 %v1723, 0.1
        %v1742 = vmul.f32 %v1724, 0.1
        %v1743 = vmul.f32 %v1725, 0.1
        %v1744 = vsel %vm1726, %v1717, %v1735
        %v1745 = vsel %vm1727, %v1718, %v1736
        %v1746 = vsel %vm1728, %v1719, %v1737
        %v1747 = vsel %vm1729, %v1720, %v1738
        %v1748 = vsel %vm1730, %v1721, %v1739
        %v1749 = vsel %vm1731, %v1722, %v1740
        %v1750 = vsel %vm1732, %v1723, %v1741
        %v1751 = vsel %vm1733, %v1724, %v1742
        %v1752 = vsel %vm1734, %v1725, %v1743
        %1753 = vst [vmem:[%s380] sm:$0xff] %v1744
        %1754 = vst [vmem:[%s380 + $0x8] sm:$0xff] %v1745
        %1755 = vst [vmem:[%s380 + $0x10] sm:$0xff] %v1746
        %1756 = vst [vmem:[%s380 + $0x18] sm:$0xff] %v1747
        %1757 = vst [vmem:[%s380 + $0x20] sm:$0xff] %v1748
        %1758 = vst [vmem:[%s380 + $0x28] sm:$0xff] %v1749
        %1759 = vst [vmem:[%s380 + $0x30] sm:$0xff] %v1750
        %1760 = vst [vmem:[%s380 + $0x38] sm:$0xff] %v1751
        %1761 = vst [vmem:[%s380 + $0x40] sm:$0xff] %v1752
        %s1762 = sand.u32 %s166, 1
        %s1763 = scalar_lea.sflag [#allocation6], %s1762
        %s1764 = sand.u32 %s166, 1
        %s1765 = smul.addr %s1764, 72
        %s1766 = scalar_lea.vmem [#allocation12], %s1765
        // Predicated region
        $region53: #{downsample_forward.1} parent=35 // pred_check
          %p1767 = pneg %p176
        $region54: #{downsample_forward.1} parent=35 // pred_check_branch
          %1769 = sbr.rel (%p1767) target = $region56
        $region55: #{downsample_forward.1} parent=35 // pred_region
          %s1770 = smul.u32 9, %s31
          %s1772 = ssub.s32 1152, 1152
          %1773 = vsyncadd %s1763, %s1772
          %s1774 = sadd.s32 %s32, %s1770
          %s1775 = smul.addr %s30, 9
          %s1776 = sadd.s32 %s1774, %s1775
          %s1777 = smul.addr %s1776, 128
          %s1778 = scalar_lea.hbm %s4, %s1777
          %s1779 = sshll.u32 %s1766, 4
          %s1780 = int_to_ptr.vmem [resolvable:$true] %s1779
          %1785 = dma.vmem_to_hbm [thread:$0]  %s1780, 1152, %s1778, %s1763, 128, 128, 8
        $region56: #{downsample_forward.1} parent=35 // pred_fallthru
          _
      $region36: #{downsample_forward.1} parent=5 // pred_fallthru
        _
      %p1786 = scmp.le.s32.totalorder 2, %s20
      // Predicated region
      $region57: #{downsample_forward.1} parent=5 // pred_check
        %p1787 = pneg %p1786
      $region58: #{downsample_forward.1} parent=5 // pred_check_branch
        %1789 = sbr.rel (%p1787) target = $region60
      $region59: #{downsample_forward.1} parent=5 // pred_region
        %s1790 = ssub.s32 %s20, 2
        // Predicated region
        $region61: #{downsample_forward.1} parent=59 // pred_check
          %p1791 = pneg %p182
        $region62: #{downsample_forward.1} parent=59 // pred_check_branch
          %1793 = sbr.rel (%p1791) target = $region64
        $region63: #{downsample_forward.1} parent=59 // pred_region
          %s1794 = sand.u32 %s167, 1
          %s1795 = scalar_lea.sflag [#allocation6], %s1794
          %s1796 = sand.u32 %s167, 1
          %s1797 = smul.addr %s1796, 72
          %s1798 = scalar_lea.vmem [#allocation12], %s1797
          %1799 = dma.done %s1795, 1152
        $region64: #{downsample_forward.1} parent=59 // pred_fallthru
          _
      $region60: #{downsample_forward.1} parent=5 // pred_fallthru
        _
    $region6: #{downsample_forward.1} parent=1 // loop_footer
      %s24 = sadd.s32 1, %s20
    $region7: #{downsample_forward.1} parent=1 // loop_footer_branch
      %19 = sbr.rel target = $region3
    $region8: #{downsample_forward.1} parent=1 // loop_exit
      _
    %1800 = vsyncpa [#allocation5], 1
    %s1801 = scalar_lea.sflag [#allocation5], 1
    %1802 = vsyncpa %s1801, 1
    %1803 = vsyncpa [#allocation8], 1
    %s1804 = scalar_lea.sflag [#allocation8], 1
    %1805 = vsyncpa %s1804, 1
    %1806 = vsyncpa [#allocation11], 1
    %1807 = vsyncpa [#allocation6], 1
    %s1808 = scalar_lea.sflag [#allocation6], 1
    %1809 = vsyncpa %s1808, 1

</llo_original>
